<compile_context>
chip_gen: v7x
topology: tpu7x:2x2x1
jax: 0.10.0
libtpu: 0.0.40
codegen_flags: <defaults>
</compile_context>

<pallas_src>
import functools

import jax
import jax.numpy as jnp
from jax import lax
from jax.experimental import pallas as pl
from jax.experimental.pallas import tpu as pltpu

EPS = 1e-5          # nn.BatchNorm2d default eps
NEG_SLOPE = 0.2     # LeakyReLU negative slope
KSIZE = 4
STRIDE = 2
LANE = 128


def _round_up(x, m):
    return (x + m - 1) // m * m


# ---------------------------------------------------------------------------
# Pass 1: conv (4 space-to-depth tap matmuls) + streaming BatchNorm statistics
# ---------------------------------------------------------------------------
def conv_stats_kernel(x_ref, w_ref, mask_ref, gamma_ref, beta_ref,
                      y_ref, scale_ref, shift_ref,
                      sum_acc, sumsq_acc, c0_acc,
                      *, ws, m_rows, inv_hw_img, inv_count):
    n = pl.program_id(1)

    # 4x4/stride-2 conv == 2x2/stride-1 conv on the space-to-depth slab ==
    # four MXU matmuls against row-shifted windows (bf16 in, f32 accumulate).
    acc = jnp.dot(x_ref[0, pl.ds(0, m_rows), :], w_ref[0],
                  preferred_element_type=jnp.float32)
    for t in range(1, 4):
        off = (t // 2) * ws + (t % 2)            # tap (qh, qw) -> row offset
        acc = acc + jnp.dot(x_ref[0, pl.ds(off, m_rows), :], w_ref[t],
                            preferred_element_type=jnp.float32)

    mask = mask_ref[0]                           # (m_rows, 1): 1.0 on valid rows
    accm = acc * mask                            # zero out edge / pad rows

    @pl.when(n == 0)
    def _init():
        sum_acc[...] = jnp.zeros_like(sum_acc)
        sumsq_acc[...] = jnp.zeros_like(sumsq_acc)
        # Center for the shifted variance accumulation (first image's mean);
        # avoids E[x^2]-E[x]^2 catastrophic cancellation.
        c0_acc[...] = jnp.sum(accm, axis=0, keepdims=True) * inv_hw_img

    centered = (acc - c0_acc[...]) * mask
    sum_acc[...] += jnp.sum(centered, axis=0, keepdims=True)
    sumsq_acc[...] += jnp.sum(centered * centered, axis=0, keepdims=True)

    # bf16 intermediate: halves the dominant HBM stream; stats stay f32.
    y_ref[0] = accm.astype(y_ref.dtype)

    @pl.when(n == pl.num_programs(1) - 1)
    def _finalize():
        m1 = sum_acc[...] * inv_count            # E[x - c0]
        mean = c0_acc[...] + m1
        var = jnp.maximum(sumsq_acc[...] * inv_count - m1 * m1, 0.0)
        scale = gamma_ref[...] * lax.rsqrt(var + EPS)
        scale_ref[...] = scale
        shift_ref[...] = beta_ref[...] - mean * scale


# ---------------------------------------------------------------------------
# Pass 2: fused BN affine (precomputed scale/shift) + LeakyReLU
# ---------------------------------------------------------------------------
def bn_apply_kernel(y_ref, scale_ref, shift_ref, out_ref):
    z = y_ref[0].astype(jnp.float32) * scale_ref[...] + shift_ref[...]
    out_ref[0] = jnp.where(z > 0, z, NEG_SLOPE * z)


# ---------------------------------------------------------------------------
# Wrapper
# ---------------------------------------------------------------------------
@jax.jit
def cnn_block_forward(x, w, gamma, beta):
    """x: [N, C_in, H, W] (NCHW), w: [C_out, C_in, 4, 4] (OIHW)."""
    N, C_in, H, W = x.shape
    C_out = w.shape[0]
    assert H % 2 == 0 and W % 2 == 0 and H >= KSIZE and W >= KSIZE, \
        "stride-2 space-to-depth path requires even H, W >= 4"
    Hs, Ws = H // 2, W // 2
    H_out, W_out = Hs - 1, Ws - 1

    M = Hs * Ws                                  # s2d positions per image
    M_rows = _round_up(M, 16)                    # rows computed per step (bf16 friendly)
    M_in = _round_up(M_rows + Ws + 1, 16)        # x slab rows incl. shift headroom
    Cd = 4 * C_in                                # space-to-depth feature width
    Cp = _round_up(C_out, LANE)

    # --- C_out tile: largest of {512, 256, 128} dividing Cp that fits VMEM ---
    def step_bytes(tc):
        return (2 * M_in * Cd * 2                # x slabs (bf16, double buffered)
                + 2 * M_rows * tc * 2            # y out blocks (bf16)
                + 3 * M_rows * tc * 4            # f32 acc / partial temporaries
                + 2 * 4 * Cd * tc * 2            # tap weights
                + 2 * M_rows * 4)                # mask
    tile_c = LANE
    for tc in (512, 256):
        if Cp % tc == 0 and step_bytes(tc) < 40 * 1024 * 1024:
            tile_c = tc
            break
    c_tiles = Cp // tile_c

    try:
        vmem_cap = int(pltpu.get_tpu_info().vmem_capacity_bytes)
    except Exception:
        vmem_cap = 64 * 1024 * 1024
    vmem_limit = int(min(max(step_bytes(tile_c) + 8 * 1024 * 1024,
                             32 * 1024 * 1024),
                         vmem_cap * 3 // 4))

    # --- single space-to-depth relayout of x (same size as x, no im2col) ---
    x_nhwc = jnp.transpose(x, (0, 2, 3, 1))                      # [N,H,W,C_in]
    x_s2d = jnp.transpose(x_nhwc.reshape(N, Hs, 2, Ws, 2, C_in),
                          (0, 1, 3, 2, 4, 5)).reshape(N, M, Cd)  # (dh,dw,ci) features
    x_s2d = jnp.pad(x_s2d.astype(jnp.bfloat16),
                    ((0, 0), (0, M_in - M), (0, 0)))

    # --- per-tap weight matrices matching the s2d feature order ---
    w_taps = jnp.transpose(w, (2, 3, 1, 0)).reshape(2, 2, 2, 2, C_in, C_out)
    w_taps = jnp.transpose(w_taps, (0, 2, 1, 3, 4, 5)).reshape(4, Cd, C_out)
    w_taps = jnp.pad(w_taps.astype(jnp.bfloat16),
                     ((0, 0), (0, 0), (0, Cp - C_out)))

    gamma_p = jnp.pad(gamma.astype(jnp.float32), (0, Cp - C_out),
                      constant_values=1.0).reshape(1, Cp)
    beta_p = jnp.pad(beta.astype(jnp.float32), (0, Cp - C_out)).reshape(1, Cp)

    # valid-output-row mask over the s2d row index (drops the last s2d row/col)
    idx = jnp.arange(M_rows, dtype=jnp.int32)
    valid = (idx < M) & (idx % Ws < W_out) & (idx // Ws < H_out)
    mask = valid.astype(jnp.float32).reshape(1, M_rows, 1)

    kernel1 = functools.partial(
        conv_stats_kernel, ws=Ws, m_rows=M_rows,
        inv_hw_img=float(1.0 / (H_out * W_out)),
        inv_count=float(1.0 / (N * H_out * W_out)))

    # --- pass 1: conv + streaming BN stats, folded scale/shift finalize ---
    y_raw, scale, shift = pl.pallas_call(
        kernel1,
        out_shape=(
            jax.ShapeDtypeStruct((N, M_rows, Cp), jnp.bfloat16),
            jax.ShapeDtypeStruct((1, Cp), jnp.float32),
            jax.ShapeDtypeStruct((1, Cp), jnp.float32),
        ),
        grid_spec=pltpu.PrefetchScalarGridSpec(
            num_scalar_prefetch=0,
            grid=(c_tiles, N),
            in_specs=[
                pl.BlockSpec((1, M_in, Cd), lambda c, n: (n, 0, 0)),
                pl.BlockSpec((4, Cd, tile_c), lambda c, n: (0, 0, c)),
                pl.BlockSpec((1, M_rows, 1), lambda c, n: (0, 0, 0)),
                pl.BlockSpec((1, tile_c), lambda c, n: (0, c)),
                pl.BlockSpec((1, tile_c), lambda c, n: (0, c)),
            ],
            out_specs=[
                pl.BlockSpec((1, M_rows, tile_c), lambda c, n: (n, 0, c)),
                pl.BlockSpec((1, tile_c), lambda c, n: (0, c)),
                pl.BlockSpec((1, tile_c), lambda c, n: (0, c)),
            ],
            scratch_shapes=[
                pltpu.VMEM((1, tile_c), jnp.float32),   # sum
                pltpu.VMEM((1, tile_c), jnp.float32),   # sum of squares (centered)
                pltpu.VMEM((1, tile_c), jnp.float32),   # centering constant
            ],
        ),
        compiler_params=pltpu.CompilerParams(
            dimension_semantics=("parallel", "arbitrary"),
            vmem_limit_bytes=vmem_limit,
        ),
    )(x_s2d, w_taps, mask, gamma_p, beta_p)

    # --- pass 2: z = y*scale + shift, LeakyReLU ---
    out_flat = pl.pallas_call(
        bn_apply_kernel,
        out_shape=jax.ShapeDtypeStruct((N, M_rows, Cp), jnp.float32),
        grid_spec=pltpu.PrefetchScalarGridSpec(
            num_scalar_prefetch=0,
            grid=(c_tiles, N),
            in_specs=[
                pl.BlockSpec((1, M_rows, tile_c), lambda c, n: (n, 0, c)),
                pl.BlockSpec((1, tile_c), lambda c, n: (0, c)),
                pl.BlockSpec((1, tile_c), lambda c, n: (0, c)),
            ],
            out_specs=pl.BlockSpec((1, M_rows, tile_c), lambda c, n: (n, 0, c)),
        ),
        compiler_params=pltpu.CompilerParams(
            dimension_semantics=("parallel", "parallel"),
            vmem_limit_bytes=vmem_limit,
        ),
    )(y_raw, scale, shift)

    # thin layout epilogue: drop padding / invalid s2d rows, back to NCHW
    out = out_flat[:, :M, :C_out].reshape(N, Hs, Ws, C_out)[:, :H_out, :W_out, :]
    return jnp.transpose(out, (0, 3, 1, 2))


# ---------------------------------------------------------------------------
# Pure-JAX reference mirroring the PyTorch module forward (train mode)
# ---------------------------------------------------------------------------
def reference_forward(x, w, gamma, beta, *, cast_bf16=False):
    if cast_bf16:
        x = x.astype(jnp.bfloat16)
        w = w.astype(jnp.bfloat16)
    y = jax.lax.conv_general_dilated(
        x, w, window_strides=(STRIDE, STRIDE), padding="VALID",
        dimension_numbers=("NCHW", "OIHW", "NCHW"),
        preferred_element_type=jnp.float32)
    mean = jnp.mean(y, axis=(0, 2, 3), keepdims=True)
    var = jnp.mean((y - mean) ** 2, axis=(0, 2, 3), keepdims=True)
    z = (y - mean) * jax.lax.rsqrt(var + EPS)
    z = z * gamma.reshape(1, -1, 1, 1) + beta.reshape(1, -1, 1, 1)
    return jnp.where(z > 0, z, NEG_SLOPE * z)


if __name__ == "__main__":
    key = jax.random.PRNGKey(0)
    k_x, k_w = jax.random.split(key)

    N, C_in, C_out, H, W = 2, 4, 8, 16, 16
    x = jax.random.normal(k_x, (N, C_in, H, W), dtype=jnp.float32)
    w = 0.1 * jax.random.normal(k_w, (C_out, C_in, KSIZE, KSIZE), dtype=jnp.float32)
    gamma = jnp.linspace(0.5, 1.5, C_out, dtype=jnp.float32)
    beta = jnp.linspace(-0.2, 0.2, C_out, dtype=jnp.float32)

    out = jax.block_until_ready(cnn_block_forward(x, w, gamma, beta))
    assert out.shape == (N, C_out, H // 2 - 1, W // 2 - 1)

    # Check vs a bf16-matched reference (same input precision as the kernel;
    # tolerance covers the bf16 intermediate-y rounding).
    ref_bf16 = jax.block_until_ready(
        reference_forward(x, w, gamma, beta, cast_bf16=True))
    assert jnp.allclose(out, ref_bf16, atol=3e-2, rtol=3e-2), \
        "mismatch vs bf16 reference"

    # Looser check vs the full-f32 PyTorch-equivalent reference.
    ref_f32 = jax.block_until_ready(reference_forward(x, w, gamma, beta))
    assert jnp.allclose(out, ref_f32, atol=8e-2, rtol=8e-2), \
        "mismatch vs f32 reference"

    print("KERNEL_OK")
</pallas_src>

<mosaic_0001>
module attributes {stable_mosaic.version = 11 : i64} {
  func.func @bn_apply_kernel(%arg0: i32, %arg1: i32, %arg2: memref<1x64x128xbf16, #tpu.memory_space<vmem>>, %arg3: memref<1x128xf32, #tpu.memory_space<vmem>>, %arg4: memref<1x128xf32, #tpu.memory_space<vmem>>, %arg5: memref<1x64x128xf32, #tpu.memory_space<vmem>>) attributes {dimension_semantics = [#tpu.dimension_semantics<parallel>, #tpu.dimension_semantics<parallel>], iteration_bounds = array<i64: 1, 2>, scalar_prefetch = 0 : i64, scratch_operands = 0 : i64, tpu.core_type = #tpu.core_type<tc>, window_params = [{transform_indices = @transform_0, window_bounds = array<i64: 1, 64, 128>}, {transform_indices = @transform_1, window_bounds = array<i64: 1, 128>}, {transform_indices = @transform_2, window_bounds = array<i64: 1, 128>}, {transform_indices = @transform_3, window_bounds = array<i64: 1, 64, 128>}]} {
    %c0 = arith.constant 0 : index
    %c0_0 = arith.constant 0 : index
    %c0_1 = arith.constant 0 : index
    %0 = vector.load %arg2[%c0, %c0_0, %c0_1] : memref<1x64x128xbf16, #tpu.memory_space<vmem>>, vector<1x64x128xbf16>
    %1 = vector.shape_cast %0 : vector<1x64x128xbf16> to vector<64x128xbf16>
    %2 = arith.extf %1 : vector<64x128xbf16> to vector<64x128xf32>
    %c0_2 = arith.constant 0 : index
    %c0_3 = arith.constant 0 : index
    %3 = vector.load %arg3[%c0_2, %c0_3] : memref<1x128xf32, #tpu.memory_space<vmem>>, vector<1x128xf32>
    %4 = vector.broadcast %3 : vector<1x128xf32> to vector<64x128xf32>
    %5 = arith.mulf %2, %4 : vector<64x128xf32>
    %c0_4 = arith.constant 0 : index
    %c0_5 = arith.constant 0 : index
    %6 = vector.load %arg4[%c0_4, %c0_5] : memref<1x128xf32, #tpu.memory_space<vmem>>, vector<1x128xf32>
    %7 = vector.broadcast %6 : vector<1x128xf32> to vector<64x128xf32>
    %8 = arith.addf %5, %7 : vector<64x128xf32>
    %cst = arith.constant 0.000000e+00 : f32
    %9 = vector.broadcast %cst : f32 to vector<64x128xf32>
    %10 = arith.cmpf ogt, %8, %9 : vector<64x128xf32>
    %cst_6 = arith.constant 2.000000e-01 : f32
    %11 = vector.broadcast %cst_6 : f32 to vector<64x128xf32>
    %12 = arith.mulf %11, %8 : vector<64x128xf32>
    %13 = arith.select %10, %8, %12 : vector<64x128xi1>, vector<64x128xf32>
    %c0_7 = arith.constant 0 : index
    %c0_8 = arith.constant 0 : index
    %c0_9 = arith.constant 0 : index
    %14 = vector.load %arg5[%c0_7, %c0_8, %c0_9] : memref<1x64x128xf32, #tpu.memory_space<vmem>>, vector<1x64x128xf32>
    %15 = vector.shape_cast %14 : vector<1x64x128xf32> to vector<64x128xf32>
    %16 = vector.shape_cast %13 : vector<64x128xf32> to vector<1x64x128xf32>
    tpu.vector_store %arg5[%c0_7, %c0_8, %c0_9], %16 {strides = array<i32>} : memref<1x64x128xf32, #tpu.memory_space<vmem>>, vector<1x64x128xf32>,
    return
  }
  func.func @transform_0(%arg0: i32, %arg1: i32) -> (i32, i32, i32) {
    %c0_i32 = arith.constant 0 : i32
    %c0_i32_0 = arith.constant 0 : i32
    return %arg1, %c0_i32, %arg0 : i32, i32, i32
  }
  func.func @transform_1(%arg0: i32, %arg1: i32) -> (i32, i32) {
    %c0_i32 = arith.constant 0 : i32
    %c0_i32_0 = arith.constant 0 : i32
    return %c0_i32, %arg0 : i32, i32
  }
  func.func @transform_2(%arg0: i32, %arg1: i32) -> (i32, i32) {
    %c0_i32 = arith.constant 0 : i32
    %c0_i32_0 = arith.constant 0 : i32
    return %c0_i32, %arg0 : i32, i32
  }
  func.func @transform_3(%arg0: i32, %arg1: i32) -> (i32, i32, i32) {
    %c0_i32 = arith.constant 0 : i32
    %c0_i32_0 = arith.constant 0 : i32
    return %arg1, %c0_i32, %arg0 : i32, i32, i32
  }
}

module attributes {stable_mosaic.version = 11 : i64} {
  func.func @conv_stats_kernel(%arg0: i32, %arg1: i32, %arg2: memref<1x80x16xbf16, #tpu.memory_space<vmem>>, %arg3: memref<4x16x128xbf16, #tpu.memory_space<vmem>>, %arg4: memref<1x64x1xf32, #tpu.memory_space<vmem>>, %arg5: memref<1x128xf32, #tpu.memory_space<vmem>>, %arg6: memref<1x128xf32, #tpu.memory_space<vmem>>, %arg7: memref<1x64x128xbf16, #tpu.memory_space<vmem>>, %arg8: memref<1x128xf32, #tpu.memory_space<vmem>>, %arg9: memref<1x128xf32, #tpu.memory_space<vmem>>, %arg10: memref<1x128xf32, #tpu.memory_space<vmem>>, %arg11: memref<1x128xf32, #tpu.memory_space<vmem>>, %arg12: memref<1x128xf32, #tpu.memory_space<vmem>>) attributes {dimension_semantics = [#tpu.dimension_semantics<parallel>, #tpu.dimension_semantics<arbitrary>], iteration_bounds = array<i64: 1, 2>, scalar_prefetch = 0 : i64, scratch_operands = 3 : i64, tpu.core_type = #tpu.core_type<tc>, window_params = [{transform_indices = @transform_0, window_bounds = array<i64: 1, 80, 16>}, {transform_indices = @transform_1, window_bounds = array<i64: 4, 16, 128>}, {pipeline_mode = #tpu.pipeline_mode<synchronous>, transform_indices = @transform_2, window_bounds = array<i64: 1, 64, 1>}, {transform_indices = @transform_3, window_bounds = array<i64: 1, 128>}, {transform_indices = @transform_4, window_bounds = array<i64: 1, 128>}, {transform_indices = @transform_5, window_bounds = array<i64: 1, 64, 128>}, {transform_indices = @transform_6, window_bounds = array<i64: 1, 128>}, {transform_indices = @transform_7, window_bounds = array<i64: 1, 128>}]} {
    %c0 = arith.constant 0 : index
    %c0_0 = arith.constant 0 : index
    %c0_1 = arith.constant 0 : index
    %0 = vector.load %arg2[%c0, %c0_0, %c0_1] : memref<1x80x16xbf16, #tpu.memory_space<vmem>>, vector<1x64x16xbf16>
    %1 = vector.shape_cast %0 : vector<1x64x16xbf16> to vector<64x16xbf16>
    %c0_2 = arith.constant 0 : index
    %c0_3 = arith.constant 0 : index
    %c0_4 = arith.constant 0 : index
    %2 = vector.load %arg3[%c0_2, %c0_3, %c0_4] : memref<4x16x128xbf16, #tpu.memory_space<vmem>>, vector<1x16x128xbf16>
    %3 = vector.shape_cast %2 : vector<1x16x128xbf16> to vector<16x128xbf16>
    %cst = arith.constant dense<0.000000e+00> : vector<64x128xf32>
    %4 = tpu.matmul %1, %3, %cst {dimension_numbers = #tpu.dot_dimension_numbers<[1], [0], [0], [1], [0, 0, 1, 1], [], []>} : vector<64x16xbf16>, vector<16x128xbf16>, vector<64x128xf32> -> vector<64x128xf32>
    %c0_5 = arith.constant 0 : index
    %c1 = arith.constant 1 : index
    %c0_6 = arith.constant 0 : index
    %5 = vector.load %arg2[%c0_5, %c1, %c0_6] : memref<1x80x16xbf16, #tpu.memory_space<vmem>>, vector<1x64x16xbf16>
    %6 = vector.shape_cast %5 : vector<1x64x16xbf16> to vector<64x16xbf16>
    %c1_7 = arith.constant 1 : index
    %c0_8 = arith.constant 0 : index
    %c0_9 = arith.constant 0 : index
    %7 = vector.load %arg3[%c1_7, %c0_8, %c0_9] : memref<4x16x128xbf16, #tpu.memory_space<vmem>>, vector<1x16x128xbf16>
    %8 = vector.shape_cast %7 : vector<1x16x128xbf16> to vector<16x128xbf16>
    %cst_10 = arith.constant dense<0.000000e+00> : vector<64x128xf32>
    %9 = tpu.matmul %6, %8, %cst_10 {dimension_numbers = #tpu.dot_dimension_numbers<[1], [0], [0], [1], [0, 0, 1, 1], [], []>} : vector<64x16xbf16>, vector<16x128xbf16>, vector<64x128xf32> -> vector<64x128xf32>
    %10 = arith.addf %4, %9 : vector<64x128xf32>
    %c0_11 = arith.constant 0 : index
    %c8 = arith.constant 8 : index
    %c0_12 = arith.constant 0 : index
    %11 = vector.load %arg2[%c0_11, %c8, %c0_12] : memref<1x80x16xbf16, #tpu.memory_space<vmem>>, vector<1x64x16xbf16>
    %12 = vector.shape_cast %11 : vector<1x64x16xbf16> to vector<64x16xbf16>
    %c2 = arith.constant 2 : index
    %c0_13 = arith.constant 0 : index
    %c0_14 = arith.constant 0 : index
    %13 = vector.load %arg3[%c2, %c0_13, %c0_14] : memref<4x16x128xbf16, #tpu.memory_space<vmem>>, vector<1x16x128xbf16>
    %14 = vector.shape_cast %13 : vector<1x16x128xbf16> to vector<16x128xbf16>
    %cst_15 = arith.constant dense<0.000000e+00> : vector<64x128xf32>
    %15 = tpu.matmul %12, %14, %cst_15 {dimension_numbers = #tpu.dot_dimension_numbers<[1], [0], [0], [1], [0, 0, 1, 1], [], []>} : vector<64x16xbf16>, vector<16x128xbf16>, vector<64x128xf32> -> vector<64x128xf32>
    %16 = arith.addf %10, %15 : vector<64x128xf32>
    %c0_16 = arith.constant 0 : index
    %c9 = arith.constant 9 : index
    %c0_17 = arith.constant 0 : index
    %17 = vector.load %arg2[%c0_16, %c9, %c0_17] : memref<1x80x16xbf16, #tpu.memory_space<vmem>>, vector<1x64x16xbf16>
    %18 = vector.shape_cast %17 : vector<1x64x16xbf16> to vector<64x16xbf16>
    %c3 = arith.constant 3 : index
    %c0_18 = arith.constant 0 : index
    %c0_19 = arith.constant 0 : index
    %19 = vector.load %arg3[%c3, %c0_18, %c0_19] : memref<4x16x128xbf16, #tpu.memory_space<vmem>>, vector<1x16x128xbf16>
    %20 = vector.shape_cast %19 : vector<1x16x128xbf16> to vector<16x128xbf16>
    %cst_20 = arith.constant dense<0.000000e+00> : vector<64x128xf32>
    %21 = tpu.matmul %18, %20, %cst_20 {dimension_numbers = #tpu.dot_dimension_numbers<[1], [0], [0], [1], [0, 0, 1, 1], [], []>} : vector<64x16xbf16>, vector<16x128xbf16>, vector<64x128xf32> -> vector<64x128xf32>
    %22 = arith.addf %16, %21 : vector<64x128xf32>
    %c0_21 = arith.constant 0 : index
    %c0_22 = arith.constant 0 : index
    %c0_23 = arith.constant 0 : index
    %23 = vector.load %arg4[%c0_21, %c0_22, %c0_23] : memref<1x64x1xf32, #tpu.memory_space<vmem>>, vector<1x64x1xf32>
    %24 = vector.shape_cast %23 : vector<1x64x1xf32> to vector<64x1xf32>
    %25 = vector.broadcast %24 : vector<64x1xf32> to vector<64x128xf32>
    %26 = arith.mulf %22, %25 : vector<64x128xf32>
    %c0_i32 = arith.constant 0 : i32
    %27 = arith.cmpi eq, %arg1, %c0_i32 : i32
    %28 = arith.extui %27 : i1 to i32
    %c0_i32_24 = arith.constant 0 : i32
    %29 = arith.cmpi ne, %28, %c0_i32_24 : i32
    scf.if %29 {
      %cst_41 = arith.constant 0.000000e+00 : f32
      %53 = vector.broadcast %cst_41 : f32 to vector<1x128xf32>
      %c0_42 = arith.constant 0 : index
      %c0_43 = arith.constant 0 : index
      %54 = vector.load %arg10[%c0_42, %c0_43] : memref<1x128xf32, #tpu.memory_space<vmem>>, vector<1x128xf32>
      tpu.vector_store %arg10[%c0_42, %c0_43], %53 {strides = array<i32>} : memref<1x128xf32, #tpu.memory_space<vmem>>, vector<1x128xf32>,
      %cst_44 = arith.constant 0.000000e+00 : f32
      %55 = vector.broadcast %cst_44 : f32 to vector<1x128xf32>
      %c0_45 = arith.constant 0 : index
      %c0_46 = arith.constant 0 : index
      %56 = vector.load %arg11[%c0_45, %c0_46] : memref<1x128xf32, #tpu.memory_space<vmem>>, vector<1x128xf32>
      tpu.vector_store %arg11[%c0_45, %c0_46], %55 {strides = array<i32>} : memref<1x128xf32, #tpu.memory_space<vmem>>, vector<1x128xf32>,
      %cst_47 = arith.constant dense<0.000000e+00> : vector<128xf32>
      %57 = vector.multi_reduction <add>, %26, %cst_47 [0] : vector<64x128xf32> to vector<128xf32>
      %58 = vector.shape_cast %57 : vector<128xf32> to vector<1x128xf32>
      %cst_48 = arith.constant 0.0204081628 : f32
      %59 = vector.broadcast %cst_48 : f32 to vector<1x128xf32>
      %60 = arith.mulf %58, %59 : vector<1x128xf32>
      %c0_49 = arith.constant 0 : index
      %c0_50 = arith.constant 0 : index
      %61 = vector.load %arg12[%c0_49, %c0_50] : memref<1x128xf32, #tpu.memory_space<vmem>>, vector<1x128xf32>
      tpu.vector_store %arg12[%c0_49, %c0_50], %60 {strides = array<i32>} : memref<1x128xf32, #tpu.memory_space<vmem>>, vector<1x128xf32>,
    } else {
    }
    %c0_25 = arith.constant 0 : index
    %c0_26 = arith.constant 0 : index
    %30 = vector.load %arg12[%c0_25, %c0_26] : memref<1x128xf32, #tpu.memory_space<vmem>>, vector<1x128xf32>
    %31 = vector.broadcast %30 : vector<1x128xf32> to vector<64x128xf32>
    %32 = arith.subf %22, %31 : vector<64x128xf32>
    %33 = vector.broadcast %24 : vector<64x1xf32> to vector<64x128xf32>
    %34 = arith.mulf %32, %33 : vector<64x128xf32>
    %c0_27 = arith.constant 0 : index
    %c0_28 = arith.constant 0 : index
    %35 = vector.load %arg10[%c0_27, %c0_28] : memref<1x128xf32, #tpu.memory_space<vmem>>, vector<1x128xf32>
    %cst_29 = arith.constant dense<0.000000e+00> : vector<128xf32>
    %36 = vector.multi_reduction <add>, %34, %cst_29 [0] : vector<64x128xf32> to vector<128xf32>
    %37 = vector.shape_cast %36 : vector<128xf32> to vector<1x128xf32>
    %38 = arith.addf %35, %37 : vector<1x128xf32>
    %c0_30 = arith.constant 0 : index
    %c0_31 = arith.constant 0 : index
    %39 = vector.load %arg10[%c0_30, %c0_31] : memref<1x128xf32, #tpu.memory_space<vmem>>, vector<1x128xf32>
    tpu.vector_store %arg10[%c0_30, %c0_31], %38 {strides = array<i32>} : memref<1x128xf32, #tpu.memory_space<vmem>>, vector<1x128xf32>,
    %c0_32 = arith.constant 0 : index
    %c0_33 = arith.constant 0 : index
    %40 = vector.load %arg11[%c0_32, %c0_33] : memref<1x128xf32, #tpu.memory_space<vmem>>, vector<1x128xf32>
    %41 = arith.mulf %34, %34 : vector<64x128xf32>
    %cst_34 = arith.constant dense<0.000000e+00> : vector<128xf32>
    %42 = vector.multi_reduction <add>, %41, %cst_34 [0] : vector<64x128xf32> to vector<128xf32>
    %43 = vector.shape_cast %42 : vector<128xf32> to vector<1x128xf32>
    %44 = arith.addf %40, %43 : vector<1x128xf32>
    %c0_35 = arith.constant 0 : index
    %c0_36 = arith.constant 0 : index
    %45 = vector.load %arg11[%c0_35, %c0_36] : memref<1x128xf32, #tpu.memory_space<vmem>>, vector<1x128xf32>
    tpu.vector_store %arg11[%c0_35, %c0_36], %44 {strides = array<i32>} : memref<1x128xf32, #tpu.memory_space<vmem>>, vector<1x128xf32>,
    %46 = arith.truncf %26 : vector<64x128xf32> to vector<64x128xbf16>
    %c0_37 = arith.constant 0 : index
    %c0_38 = arith.constant 0 : index
    %c0_39 = arith.constant 0 : index
    %47 = vector.load %arg7[%c0_37, %c0_38, %c0_39] : memref<1x64x128xbf16, #tpu.memory_space<vmem>>, vector<1x64x128xbf16>
    %48 = vector.shape_cast %47 : vector<1x64x128xbf16> to vector<64x128xbf16>
    %49 = vector.shape_cast %46 : vector<64x128xbf16> to vector<1x64x128xbf16>
    tpu.vector_store %arg7[%c0_37, %c0_38, %c0_39], %49 {strides = array<i32>} : memref<1x64x128xbf16, #tpu.memory_space<vmem>>, vector<1x64x128xbf16>,
    %c1_i32 = arith.constant 1 : i32
    %50 = arith.cmpi eq, %arg1, %c1_i32 : i32
    %51 = arith.extui %50 : i1 to i32
    %c0_i32_40 = arith.constant 0 : i32
    %52 = arith.cmpi ne, %51, %c0_i32_40 : i32
    scf.if %52 {
      %c0_41 = arith.constant 0 : index
      %c0_42 = arith.constant 0 : index
      %53 = vector.load %arg10[%c0_41, %c0_42] : memref<1x128xf32, #tpu.memory_space<vmem>>, vector<1x128xf32>
      %cst_43 = arith.constant 0.0102040814 : f32
      %54 = vector.broadcast %cst_43 : f32 to vector<1x128xf32>
      %55 = arith.mulf %53, %54 : vector<1x128xf32>
      %c0_44 = arith.constant 0 : index
      %c0_45 = arith.constant 0 : index
      %56 = vector.load %arg12[%c0_44, %c0_45] : memref<1x128xf32, #tpu.memory_space<vmem>>, vector<1x128xf32>
      %57 = arith.addf %56, %55 : vector<1x128xf32>
      %c0_46 = arith.constant 0 : index
      %c0_47 = arith.constant 0 : index
      %58 = vector.load %arg11[%c0_46, %c0_47] : memref<1x128xf32, #tpu.memory_space<vmem>>, vector<1x128xf32>
      %cst_48 = arith.constant 0.0102040814 : f32
      %59 = vector.broadcast %cst_48 : f32 to vector<1x128xf32>
      %60 = arith.mulf %58, %59 : vector<1x128xf32>
      %61 = arith.mulf %55, %55 : vector<1x128xf32>
      %62 = arith.subf %60, %61 : vector<1x128xf32>
      %cst_49 = arith.constant 0.000000e+00 : f32
      %63 = vector.broadcast %cst_49 : f32 to vector<1x128xf32>
      %64 = arith.maximumf %62, %63 : vector<1x128xf32>
      %c0_50 = arith.constant 0 : index
      %c0_51 = arith.constant 0 : index
      %65 = vector.load %arg5[%c0_50, %c0_51] : memref<1x128xf32, #tpu.memory_space<vmem>>, vector<1x128xf32>
      %cst_52 = arith.constant 9.99999974E-6 : f32
      %66 = vector.broadcast %cst_52 : f32 to vector<1x128xf32>
      %67 = arith.addf %64, %66 : vector<1x128xf32>
      %68 = math.rsqrt %67 : vector<1x128xf32>
      %69 = arith.mulf %65, %68 : vector<1x128xf32>
      %c0_53 = arith.constant 0 : index
      %c0_54 = arith.constant 0 : index
      %70 = vector.load %arg8[%c0_53, %c0_54] : memref<1x128xf32, #tpu.memory_space<vmem>>, vector<1x128xf32>
      tpu.vector_store %arg8[%c0_53, %c0_54], %69 {strides = array<i32>} : memref<1x128xf32, #tpu.memory_space<vmem>>, vector<1x128xf32>,
      %c0_55 = arith.constant 0 : index
      %c0_56 = arith.constant 0 : index
      %71 = vector.load %arg6[%c0_55, %c0_56] : memref<1x128xf32, #tpu.memory_space<vmem>>, vector<1x128xf32>
      %72 = arith.mulf %57, %69 : vector<1x128xf32>
      %73 = arith.subf %71, %72 : vector<1x128xf32>
      %c0_57 = arith.constant 0 : index
      %c0_58 = arith.constant 0 : index
      %74 = vector.load %arg9[%c0_57, %c0_58] : memref<1x128xf32, #tpu.memory_space<vmem>>, vector<1x128xf32>
      tpu.vector_store %arg9[%c0_57, %c0_58], %73 {strides = array<i32>} : memref<1x128xf32, #tpu.memory_space<vmem>>, vector<1x128xf32>,
    } else {
    }
    return
  }
  func.func @transform_0(%arg0: i32, %arg1: i32) -> (i32, i32, i32) {
    %c0_i32 = arith.constant 0 : i32
    %c0_i32_0 = arith.constant 0 : i32
    %c0_i32_1 = arith.constant 0 : i32
    return %arg1, %c0_i32, %c0_i32_0 : i32, i32, i32
  }
  func.func @transform_1(%arg0: i32, %arg1: i32) -> (i32, i32, i32) {
    %c0_i32 = arith.constant 0 : i32
    %c0_i32_0 = arith.constant 0 : i32
    %c0_i32_1 = arith.constant 0 : i32
    return %c0_i32, %c0_i32_0, %arg0 : i32, i32, i32
  }
  func.func @transform_2(%arg0: i32, %arg1: i32) -> (i32, i32, i32) {
    %c0_i32 = arith.constant 0 : i32
    %c0_i32_0 = arith.constant 0 : i32
    %c0_i32_1 = arith.constant 0 : i32
    %c0_i32_2 = arith.constant 0 : i32
    return %c0_i32, %c0_i32_0, %c0_i32_1 : i32, i32, i32
  }
  func.func @transform_3(%arg0: i32, %arg1: i32) -> (i32, i32) {
    %c0_i32 = arith.constant 0 : i32
    %c0_i32_0 = arith.constant 0 : i32
    return %c0_i32, %arg0 : i32, i32
  }
  func.func @transform_4(%arg0: i32, %arg1: i32) -> (i32, i32) {
    %c0_i32 = arith.constant 0 : i32
    %c0_i32_0 = arith.constant 0 : i32
    return %c0_i32, %arg0 : i32, i32
  }
  func.func @transform_5(%arg0: i32, %arg1: i32) -> (i32, i32, i32) {
    %c0_i32 = arith.constant 0 : i32
    %c0_i32_0 = arith.constant 0 : i32
    return %arg1, %c0_i32, %arg0 : i32, i32, i32
  }
  func.func @transform_6(%arg0: i32, %arg1: i32) -> (i32, i32) {
    %c0_i32 = arith.constant 0 : i32
    %c0_i32_0 = arith.constant 0 : i32
    return %c0_i32, %arg0 : i32, i32
  }
  func.func @transform_7(%arg0: i32, %arg1: i32) -> (i32, i32) {
    %c0_i32 = arith.constant 0 : i32
    %c0_i32_0 = arith.constant 0 : i32
    return %c0_i32, %arg0 : i32, i32
  }
}

</mosaic_0001>

<llo_original>
// kernel: cnn_block_forward.3
$region0: #{cnn_block_forward.3}
  #allocation0 [shape = 'u32[]', space=smem, size = 0x4, offset = 0x4, fixed_abs, tag = 'smem constant byte address 0x4 - core index']
  #allocation1 [shape = 'u32[144,128]{1,0:T(1,128)}', space=vmem, size = 0x12000, scoped, tag = 'internal scratch']
  %s0 = inlined_call_operand.vmem [shape: bf16[2,64,128], index: 0, kind: input, shape index: {}]
  %s1 = inlined_call_operand.vmem [shape: f32[1,128], index: 1, kind: input, shape index: {}]
  %s2 = inlined_call_operand.vmem [shape: f32[1,128], index: 2, kind: input, shape index: {}]
  %s3 = inlined_call_operand.vmem [shape: f32[2,64,128], index: 3, kind: output, shape index: {}]
  %s4 = sld [smem:[#allocation0]]
  $region45: #{cnn_block_forward.3} parent=0
    _
  %s6 = ssub.s32 1, %s4
  %s7 = scalar_select 0, %s6, %s4
  loop: start=0, step=1, limit=4
  $region2: #{cnn_block_forward.3} parent=0 // loop_pre_header
    _
  $region3: #{cnn_block_forward.3} parent=0 // loop_header
    %s9 = sphi 0, %s13
    %p10 = scmp.ge.s32.totalorder %s9, 4
    %s16 = sphi 0, %s28
    %s17 = sphi 0, %s24
    %s18 = sphi 0, %s16
    %s19 = sphi 0, %s17
    %s20 = sphi 0, %s18
    %s21 = sphi 0, %s19
    %s33 = sphi 0, %s35
    %s36 = sphi 0, %s33
    %s37 = sphi 0, %s36
    %s53 = sphi 0, %s37
    %s59 = sphi 0, %s61
    %s62 = sphi 0, %s59
    %s63 = sphi 0, %s62
    %s79 = sphi 0, %s63
    %s85 = sphi 0, %s87
    %s88 = sphi 0, %s85
    %s89 = sphi 0, %s88
    %s105 = sphi 0, %s89
    %s113 = sphi 0, %s115
    %s116 = sphi 0, %s113
    %s117 = sphi 0, %s116
    %s133 = sphi 0, %s117
  $region4: #{cnn_block_forward.3} parent=0 // loop_header_branch
    %12 = sbr.rel (%p10) target = $region8
  $region5: #{cnn_block_forward.3} parent=0 // loop_body
    %s14 = ssub.s32 %s9, 1
    %s15 = ssub.s32 %s9, 2
    %s22 = sadd.s32 1, %s17
    %p23 = scmp.ge.s32.totalorder %s22, 2
    %s24 = scalar_select %p23, 0, %s22
    %s25 = sadd.s32 1, %s16
    %s26 = scalar_select %p23, %s25, %s16
    %p27 = scmp.ge.s32.totalorder %s26, 1
    %s28 = scalar_select %p27, 0, %s26
    %s29 = ssub.s32 %s17, %s24
    %s30 = ssub.s32 %s16, %s28
    %s31 = sor.u32 %s29, %s30
    %p32 = scmp.eq.s32.totalorder %s31, 0
    %s34 = sadd.s32 %s33, 1
    %s35 = scalar_select %p32, %s33, %s34
    %p38 = pneg %p32
    %p39 = scmp.eq.s32.totalorder %s9, 1
    %p40 = por %p38, %p39
    %p41 = scmp.ne.s32.totalorder %s33, %s36
    %p42 = scmp.eq.s32.totalorder %s9, 0
    %p43 = por %p41, %p42
    %p44 = scmp.ne.s32.totalorder %s33, %s36
    %p45 = scmp.eq.s32.totalorder %s14, 1
    %p46 = por %p44, %p45
    %p47 = scmp.ne.s32.totalorder %s36, %s37
    %p48 = scmp.eq.s32.totalorder %s14, 0
    %p49 = por %p47, %p48
    %p50 = scmp.ne.s32.totalorder %s36, %s37
    %p51 = scmp.eq.s32.totalorder %s15, 1
    %p52 = por %p50, %p51
    %p54 = scmp.ne.s32.totalorder %s37, %s53
    %p55 = scmp.eq.s32.totalorder %s15, 0
    %p56 = por %p54, %p55
    %s57 = ssub.s32 %s16, %s28
    %p58 = scmp.eq.s32.totalorder %s57, 0
    %s60 = sadd.s32 %s59, 1
    %s61 = scalar_select %p58, %s59, %s60
    %p64 = pneg %p58
    %p65 = scmp.eq.s32.totalorder %s9, 1
    %p66 = por %p64, %p65
    %p67 = scmp.ne.s32.totalorder %s59, %s62
    %p68 = scmp.eq.s32.totalorder %s9, 0
    %p69 = por %p67, %p68
    %p70 = scmp.ne.s32.totalorder %s59, %s62
    %p71 = scmp.eq.s32.totalorder %s14, 1
    %p72 = por %p70, %p71
    %p73 = scmp.ne.s32.totalorder %s62, %s63
    %p74 = scmp.eq.s32.totalorder %s14, 0
    %p75 = por %p73, %p74
    %p76 = scmp.ne.s32.totalorder %s62, %s63
    %p77 = scmp.eq.s32.totalorder %s15, 1
    %p78 = por %p76, %p77
    %p80 = scmp.ne.s32.totalorder %s63, %s79
    %p81 = scmp.eq.s32.totalorder %s15, 0
    %p82 = por %p80, %p81
    %s83 = ssub.s32 %s16, %s28
    %p84 = scmp.eq.s32.totalorder %s83, 0
    %s86 = sadd.s32 %s85, 1
    %s87 = scalar_select %p84, %s85, %s86
    %p90 = pneg %p84
    %p91 = scmp.eq.s32.totalorder %s9, 1
    %p92 = por %p90, %p91
    %p93 = scmp.ne.s32.totalorder %s85, %s88
    %p94 = scmp.eq.s32.totalorder %s9, 0
    %p95 = por %p93, %p94
    %p96 = scmp.ne.s32.totalorder %s85, %s88
    %p97 = scmp.eq.s32.totalorder %s14, 1
    %p98 = por %p96, %p97
    %p99 = scmp.ne.s32.totalorder %s88, %s89
    %p100 = scmp.eq.s32.totalorder %s14, 0
    %p101 = por %p99, %p100
    %p102 = scmp.ne.s32.totalorder %s88, %s89
    %p103 = scmp.eq.s32.totalorder %s15, 1
    %p104 = por %p102, %p103
    %p106 = scmp.ne.s32.totalorder %s89, %s105
    %p107 = scmp.eq.s32.totalorder %s15, 0
    %p108 = por %p106, %p107
    %s109 = ssub.s32 %s17, %s24
    %s110 = ssub.s32 %s16, %s28
    %s111 = sor.u32 %s109, %s110
    %p112 = scmp.eq.s32.totalorder %s111, 0
    %s114 = sadd.s32 %s113, 1
    %s115 = scalar_select %p112, %s113, %s114
    %p118 = pneg %p112
    %p119 = scmp.eq.s32.totalorder %s9, 1
    %p120 = por %p118, %p119
    %p121 = scmp.ne.s32.totalorder %s113, %s116
    %p122 = scmp.eq.s32.totalorder %s9, 0
    %p123 = por %p121, %p122
    %p124 = scmp.ne.s32.totalorder %s113, %s116
    %p125 = scmp.eq.s32.totalorder %s14, 1
    %p126 = por %p124, %p125
    %p127 = scmp.ne.s32.totalorder %s116, %s117
    %p128 = scmp.eq.s32.totalorder %s14, 0
    %p129 = por %p127, %p128
    %p130 = scmp.ne.s32.totalorder %s116, %s117
    %p131 = scmp.eq.s32.totalorder %s15, 1
    %p132 = por %p130, %p131
    %p134 = scmp.ne.s32.totalorder %s117, %s133
    %p135 = scmp.eq.s32.totalorder %s15, 0
    %p136 = por %p134, %p135
    %p137 = scmp.le.s32.totalorder 1, %s9
    %p138 = scmp.lt.s32.totalorder %s9, 3
    %p139 = pnand %p137, %p138
    %p140 = pneg %p139
    // Predicated region
    $region9: #{cnn_block_forward.3} parent=5 // pred_check
      _
    $region10: #{cnn_block_forward.3} parent=5 // pred_check_branch
      %142 = sbr.rel (%p139) target = $region12
    $region11: #{cnn_block_forward.3} parent=5 // pred_region
      %s143 = ssub.s32 %s9, 1
      // Predicated region
      $region13: #{cnn_block_forward.3} parent=11 // pred_check
        %p144 = pneg %p75
      $region14: #{cnn_block_forward.3} parent=11 // pred_check_branch
        %146 = sbr.rel (%p144) target = $region16
      $region15: #{cnn_block_forward.3} parent=11 // pred_region
        %p147 = scmp.lt.s32.totalorder %s18, 0
        %s148 = scalar_select %p147, %s18, 0
        %s149 = scalar_lea.vmem %s1, %s148
      $region16: #{cnn_block_forward.3} parent=11 // pred_fallthru
        _
      // Predicated region
      $region17: #{cnn_block_forward.3} parent=11 // pred_check
        %p150 = pneg %p101
      $region18: #{cnn_block_forward.3} parent=11 // pred_check_branch
        %152 = sbr.rel (%p150) target = $region20
      $region19: #{cnn_block_forward.3} parent=11 // pred_region
        %p153 = scmp.lt.s32.totalorder %s18, 0
        %s154 = scalar_select %p153, %s18, 0
        %s155 = scalar_lea.vmem %s2, %s154
      $region20: #{cnn_block_forward.3} parent=11 // pred_fallthru
        _
    $region12: #{cnn_block_forward.3} parent=5 // pred_fallthru
      _
    %p156 = scmp.lt.s32.totalorder %s9, 2
    // Predicated region
    $region21: #{cnn_block_forward.3} parent=5 // pred_check
      %p157 = pneg %p156
    $region22: #{cnn_block_forward.3} parent=5 // pred_check_branch
      %159 = sbr.rel (%p157) target = $region24
    $region23: #{cnn_block_forward.3} parent=5 // pred_region
      // Predicated region
      $region25: #{cnn_block_forward.3} parent=23 // pred_check
        %p160 = pneg %p43
      $region26: #{cnn_block_forward.3} parent=23 // pred_check_branch
        %162 = sbr.rel (%p160) target = $region28
      $region27: #{cnn_block_forward.3} parent=23 // pred_region
        %p163 = scmp.lt.s32.totalorder %s17, 1
        %s164 = scalar_select %p163, %s17, 1
        %p165 = scmp.lt.s32.totalorder %s16, 0
        %s166 = scalar_select %p165, %s16, 0
        %s167 = smul.addr %s164, 8
        %s168 = sadd.s32 %s166, %s167
        %s169 = smul.addr %s168, 4
        %s170 = scalar_lea.vmem %s0, %s169
      $region28: #{cnn_block_forward.3} parent=23 // pred_fallthru
        _
    $region24: #{cnn_block_forward.3} parent=5 // pred_fallthru
      _
    %p171 = scmp.le.s32.totalorder 1, %s9
    %p172 = scmp.lt.s32.totalorder %s9, 3
    %p173 = pnand %p171, %p172
    %p174 = pneg %p173
    // Predicated region
    $region29: #{cnn_block_forward.3} parent=5 // pred_check
      _
    $region30: #{cnn_block_forward.3} parent=5 // pred_check_branch
      %176 = sbr.rel (%p173) target = $region32
    $region31: #{cnn_block_forward.3} parent=5 // pred_region
      %s177 = ssub.s32 %s9, 1
      %p178 = scmp.lt.s32.totalorder %s19, 1
      %s179 = scalar_select %p178, %s19, 1
      %p180 = scmp.lt.s32.totalorder %s18, 0
      %s181 = scalar_select %p180, %s18, 0
      %s182 = smul.addr %s179, 8
      %s183 = sadd.s32 %s181, %s182
      %s184 = smul.addr %s183, 4
      %s185 = scalar_lea.vmem %s0, %s184
      %p186 = pneg %p49
      %p187 = pneg %p46
      %p188 = scmp.lt.s32.totalorder %s18, 0
      %s189 = scalar_select %p188, %s18, 0
      %s190 = scalar_lea.vmem %s1, %s189
      %p191 = pneg %p75
      %p192 = pneg %p72
      %p193 = scmp.lt.s32.totalorder %s18, 0
      %s194 = scalar_select %p193, %s18, 0
      %s195 = scalar_lea.vmem %s2, %s194
      %p196 = pneg %p101
      %p197 = pneg %p98
      %p198 = pneg %p129
      %p199 = pneg %p126
      %p200 = scmp.lt.s32.totalorder %s19, 1
      %s201 = scalar_select %p200, %s19, 1
      %p202 = scmp.lt.s32.totalorder %s18, 0
      %s203 = scalar_select %p202, %s18, 0
      %s204 = smul.addr %s201, 8
      %s205 = sadd.s32 %s203, %s204
      %s206 = smul.addr %s205, 8
      %s207 = scalar_lea.vmem %s3, %s206
      %p208 = scmp.lt.s32.totalorder %s19, 1
      %s209 = scalar_select %p208, %s19, 1
      %p210 = scmp.lt.s32.totalorder %s18, 0
      %s211 = scalar_select %p210, %s18, 0
      %s212 = smul.addr %s209, 8
      %s213 = sadd.s32 %s211, %s212
      %s214 = smul.addr %s213, 4
      %s215 = scalar_lea.vmem %s0, %s214
      %p216 = scmp.lt.s32.totalorder %s18, 0
      %s217 = scalar_select %p216, %s18, 0
      %s218 = scalar_lea.vmem %s1, %s217
      %p219 = scmp.lt.s32.totalorder %s18, 0
      %s220 = scalar_select %p219, %s18, 0
      %s221 = scalar_lea.vmem %s2, %s220
      %p222 = scmp.lt.s32.totalorder %s19, 1
      %s223 = scalar_select %p222, %s19, 1
      %p224 = scmp.lt.s32.totalorder %s18, 0
      %s225 = scalar_select %p224, %s18, 0
      %s226 = smul.addr %s223, 8
      %s227 = sadd.s32 %s225, %s226
      %s228 = smul.addr %s227, 8
      %s229 = scalar_lea.vmem %s3, %s228
      %v230 = vld [vmem:[%s215] sm:$0xf]
      %v231 = vld [vmem:[%s215 + $0x4] sm:$0xf]
      %v232 = vld [vmem:[%s215 + $0x8] sm:$0xf]
      %v233 = vld [vmem:[%s215 + $0xc] sm:$0xf]
      %v234 = vld [vmem:[%s215 + $0x10] sm:$0xf]
      %v235 = vld [vmem:[%s215 + $0x14] sm:$0xf]
      %v236 = vld [vmem:[%s215 + $0x18] sm:$0xf]
      %v237 = vld [vmem:[%s215 + $0x1c] sm:$0xf]
      %v238 = vunpack.c.l.bf16 %v230
      %v239 = vunpack.c.l.bf16 %v231
      %v240 = vunpack.c.l.bf16 %v232
      %v241 = vunpack.c.l.bf16 %v233
      %v242 = vunpack.c.l.bf16 %v234
      %v243 = vunpack.c.l.bf16 %v235
      %v244 = vunpack.c.l.bf16 %v236
      %v245 = vunpack.c.l.bf16 %v237
      %v246 = vld [vmem:[%s218] sm:$0x1]
      %v248 = vlaneseq
      %v249 = vshrl.u32 %v248, 7
      %v250 = vsub.s32 0, %v249
      %v251 = vrot.slane %v246, %v250
      %v253 = vmul.f32 %v238, %v251
      %v254 = vmul.f32 %v239, %v251
      %v255 = vmul.f32 %v240, %v251
      %v256 = vmul.f32 %v241, %v251
      %v257 = vmul.f32 %v242, %v251
      %v258 = vmul.f32 %v243, %v251
      %v259 = vmul.f32 %v244, %v251
      %v260 = vmul.f32 %v245, %v251
      %v261 = vld [vmem:[%s221] sm:$0x1]
      %v263 = vlaneseq
      %v264 = vshrl.u32 %v263, 7
      %v265 = vsub.s32 0, %v264
      %v266 = vrot.slane %v261, %v265
      %v268 = vadd.f32 %v253, %v266
      %v269 = vadd.f32 %v254, %v266
      %v270 = vadd.f32 %v255, %v266
      %v271 = vadd.f32 %v256, %v266
      %v272 = vadd.f32 %v257, %v266
      %v273 = vadd.f32 %v258, %v266
      %v274 = vadd.f32 %v259, %v266
      %v275 = vadd.f32 %v260, %v266
      %vm276 = vcmp.gt.f32.partialorder %v268, 0.0
      %vm277 = vcmp.gt.f32.partialorder %v269, 0.0
      %vm278 = vcmp.gt.f32.partialorder %v270, 0.0
      %vm279 = vcmp.gt.f32.partialorder %v271, 0.0
      %vm280 = vcmp.gt.f32.partialorder %v272, 0.0
      %vm281 = vcmp.gt.f32.partialorder %v273, 0.0
      %vm282 = vcmp.gt.f32.partialorder %v274, 0.0
      %vm283 = vcmp.gt.f32.partialorder %v275, 0.0
      %v284 = vmul.f32 %v268, 0.2
      %v285 = vmul.f32 %v269, 0.2
      %v286 = vmul.f32 %v270, 0.2
      %v287 = vmul.f32 %v271, 0.2
      %v288 = vmul.f32 %v272, 0.2
      %v289 = vmul.f32 %v273, 0.2
      %v290 = vmul.f32 %v274, 0.2
      %v291 = vmul.f32 %v275, 0.2
      %v292 = vsel %vm276, %v268, %v284
      %v293 = vsel %vm277, %v269, %v285
      %v294 = vsel %vm278, %v270, %v286
      %v295 = vsel %vm279, %v271, %v287
      %v296 = vsel %vm280, %v272, %v288
      %v297 = vsel %vm281, %v273, %v289
      %v298 = vsel %vm282, %v274, %v290
      %v299 = vsel %vm283, %v275, %v291
      %300 = vst [vmem:[%s229] sm:$0xff] %v292
      %301 = vst [vmem:[%s229 + $0x8] sm:$0xff] %v293
      %302 = vst [vmem:[%s229 + $0x10] sm:$0xff] %v294
      %303 = vst [vmem:[%s229 + $0x18] sm:$0xff] %v295
      %304 = vst [vmem:[%s229 + $0x20] sm:$0xff] %v296
      %305 = vst [vmem:[%s229 + $0x28] sm:$0xff] %v297
      %306 = vst [vmem:[%s229 + $0x30] sm:$0xff] %v298
      %307 = vst [vmem:[%s229 + $0x38] sm:$0xff] %v299
      %p308 = scmp.lt.s32.totalorder %s19, 1
      %s309 = scalar_select %p308, %s19, 1
      %p310 = scmp.lt.s32.totalorder %s18, 0
      %s311 = scalar_select %p310, %s18, 0
      %s312 = smul.addr %s309, 8
      %s313 = sadd.s32 %s311, %s312
      %s314 = smul.addr %s313, 8
      %s315 = scalar_lea.vmem %s3, %s314
      // Predicated region
      $region33: #{cnn_block_forward.3} parent=31 // pred_check
        %p316 = pneg %p126
      $region34: #{cnn_block_forward.3} parent=31 // pred_check_branch
        %318 = sbr.rel (%p316) target = $region36
      $region35: #{cnn_block_forward.3} parent=31 // pred_region
        _
      $region36: #{cnn_block_forward.3} parent=31 // pred_fallthru
        _
    $region32: #{cnn_block_forward.3} parent=5 // pred_fallthru
      _
    %p319 = scmp.le.s32.totalorder 2, %s9
    // Predicated region
    $region37: #{cnn_block_forward.3} parent=5 // pred_check
      %p320 = pneg %p319
    $region38: #{cnn_block_forward.3} parent=5 // pred_check_branch
      %322 = sbr.rel (%p320) target = $region40
    $region39: #{cnn_block_forward.3} parent=5 // pred_region
      %s323 = ssub.s32 %s9, 2
      // Predicated region
      $region41: #{cnn_block_forward.3} parent=39 // pred_check
        %p324 = pneg %p132
      $region42: #{cnn_block_forward.3} parent=39 // pred_check_branch
        %326 = sbr.rel (%p324) target = $region44
      $region43: #{cnn_block_forward.3} parent=39 // pred_region
        %p327 = scmp.lt.s32.totalorder %s21, 1
        %s328 = scalar_select %p327, %s21, 1
        %p329 = scmp.lt.s32.totalorder %s20, 0
        %s330 = scalar_select %p329, %s20, 0
        %s331 = smul.addr %s328, 8
        %s332 = sadd.s32 %s330, %s331
        %s333 = smul.addr %s332, 8
        %s334 = scalar_lea.vmem %s3, %s333
      $region44: #{cnn_block_forward.3} parent=39 // pred_fallthru
        _
    $region40: #{cnn_block_forward.3} parent=5 // pred_fallthru
      _
  $region6: #{cnn_block_forward.3} parent=0 // loop_footer
    %s13 = sadd.s32 1, %s9
  $region7: #{cnn_block_forward.3} parent=0 // loop_footer_branch
    %8 = sbr.rel target = $region3
  $region8: #{cnn_block_forward.3} parent=0 // loop_exit
    _

// kernel: cnn_block_forward.2
$region0: #{cnn_block_forward.2}
  #allocation0 [shape = 'u32[]', space=smem, size = 0x4, offset = 0x4, fixed_abs, tag = 'smem constant byte address 0x4 - core index']
  #allocation1 [shape = 'u32[144,128]{1,0:T(1,128)}', space=vmem, size = 0x12000, scoped, tag = 'internal scratch']
  #allocation2 [shape = 'f32[1,128]{1,0:T(1,128)}', space=vmem, size = 0x200, scoped, tag = 'scratch operand']
  #allocation3 [shape = 'f32[1,128]{1,0:T(1,128)}', space=vmem, size = 0x200, scoped, tag = 'scratch operand']
  #allocation4 [shape = 'f32[1,128]{1,0:T(1,128)}', space=vmem, size = 0x200, scoped, tag = 'scratch operand']
  %s0 = inlined_call_operand.vmem [shape: bf16[2,80,16], index: 0, kind: input, shape index: {}]
  %s1 = inlined_call_operand.vmem [shape: bf16[4,16,128], index: 1, kind: input, shape index: {}]
  %s2 = inlined_call_operand.vmem [shape: f32[1,64,1], index: 2, kind: input, shape index: {}]
  %s3 = inlined_call_operand.vmem [shape: f32[1,128], index: 3, kind: input, shape index: {}]
  %s4 = inlined_call_operand.vmem [shape: f32[1,128], index: 4, kind: input, shape index: {}]
  %s5 = inlined_call_operand.vmem [shape: bf16[2,64,128], index: 5, kind: output, shape index: {0}]
  %s6 = inlined_call_operand.vmem [shape: f32[1,128], index: 6, kind: output, shape index: {1}]
  %s7 = inlined_call_operand.vmem [shape: f32[1,128], index: 7, kind: output, shape index: {2}]
  %8 = xla_tuple %s5, %s6, %s7
  %s9 = sld [smem:[#allocation0]]
  $region77: #{cnn_block_forward.2} parent=0
    _
  %s11 = ssub.s32 1, %s9
  %s12 = scalar_select 0, %s11, %s9
  loop: start=0, step=1, limit=4
  $region2: #{cnn_block_forward.2} parent=0 // loop_pre_header
    _
  $region3: #{cnn_block_forward.2} parent=0 // loop_header
    %s14 = sphi 0, %s18
    %p15 = scmp.ge.s32.totalorder %s14, 4
    %s21 = sphi 0, %s33
    %s22 = sphi 0, %s29
    %s23 = sphi 0, %s21
    %s24 = sphi 0, %s22
    %s25 = sphi 0, %s23
    %s26 = sphi 0, %s24
    %s36 = sphi 0, %s38
    %s39 = sphi 0, %s36
    %s40 = sphi 0, %s39
    %s56 = sphi 0, %s40
    %s62 = sphi 0, %s64
    %s65 = sphi 0, %s62
    %s66 = sphi 0, %s65
    %s82 = sphi 0, %s66
    %s86 = sphi 0, %s86
    %s88 = sphi 0, %s86
    %s89 = sphi 0, %s88
    %s103 = sphi 0, %s89
    %s109 = sphi 0, %s111
    %s112 = sphi 0, %s109
    %s113 = sphi 0, %s112
    %s129 = sphi 0, %s113
    %s135 = sphi 0, %s137
    %s138 = sphi 0, %s135
    %s139 = sphi 0, %s138
    %s155 = sphi 0, %s139
    %s163 = sphi 0, %s165
    %s166 = sphi 0, %s163
    %s167 = sphi 0, %s166
    %s183 = sphi 0, %s167
    %s189 = sphi 0, %s191
    %s192 = sphi 0, %s189
    %s193 = sphi 0, %s192
    %s209 = sphi 0, %s193
    %s215 = sphi 0, %s217
    %s218 = sphi 0, %s215
    %s219 = sphi 0, %s218
    %s235 = sphi 0, %s219
  $region4: #{cnn_block_forward.2} parent=0 // loop_header_branch
    %17 = sbr.rel (%p15) target = $region8
  $region5: #{cnn_block_forward.2} parent=0 // loop_body
    %s19 = ssub.s32 %s14, 1
    %s20 = ssub.s32 %s14, 2
    %s27 = sadd.s32 1, %s22
    %p28 = scmp.ge.s32.totalorder %s27, 2
    %s29 = scalar_select %p28, 0, %s27
    %s30 = sadd.s32 1, %s21
    %s31 = scalar_select %p28, %s30, %s21
    %p32 = scmp.ge.s32.totalorder %s31, 1
    %s33 = scalar_select %p32, 0, %s31
    %s34 = ssub.s32 %s22, %s29
    %p35 = scmp.eq.s32.totalorder %s34, 0
    %s37 = sadd.s32 %s36, 1
    %s38 = scalar_select %p35, %s36, %s37
    %p41 = pneg %p35
    %p42 = scmp.eq.s32.totalorder %s14, 1
    %p43 = por %p41, %p42
    %p44 = scmp.ne.s32.totalorder %s36, %s39
    %p45 = scmp.eq.s32.totalorder %s14, 0
    %p46 = por %p44, %p45
    %p47 = scmp.ne.s32.totalorder %s36, %s39
    %p48 = scmp.eq.s32.totalorder %s19, 1
    %p49 = por %p47, %p48
    %p50 = scmp.ne.s32.totalorder %s39, %s40
    %p51 = scmp.eq.s32.totalorder %s19, 0
    %p52 = por %p50, %p51
    %p53 = scmp.ne.s32.totalorder %s39, %s40
    %p54 = scmp.eq.s32.totalorder %s20, 1
    %p55 = por %p53, %p54
    %p57 = scmp.ne.s32.totalorder %s40, %s56
    %p58 = scmp.eq.s32.totalorder %s20, 0
    %p59 = por %p57, %p58
    %s60 = ssub.s32 %s21, %s33
    %p61 = scmp.eq.s32.totalorder %s60, 0
    %s63 = sadd.s32 %s62, 1
    %s64 = scalar_select %p61, %s62, %s63
    %p67 = pneg %p61
    %p68 = scmp.eq.s32.totalorder %s14, 1
    %p69 = por %p67, %p68
    %p70 = scmp.ne.s32.totalorder %s62, %s65
    %p71 = scmp.eq.s32.totalorder %s14, 0
    %p72 = por %p70, %p71
    %p73 = scmp.ne.s32.totalorder %s62, %s65
    %p74 = scmp.eq.s32.totalorder %s19, 1
    %p75 = por %p73, %p74
    %p76 = scmp.ne.s32.totalorder %s65, %s66
    %p77 = scmp.eq.s32.totalorder %s19, 0
    %p78 = por %p76, %p77
    %p79 = scmp.ne.s32.totalorder %s65, %s66
    %p80 = scmp.eq.s32.totalorder %s20, 1
    %p81 = por %p79, %p80
    %p83 = scmp.ne.s32.totalorder %s66, %s82
    %p84 = scmp.eq.s32.totalorder %s20, 0
    %p85 = por %p83, %p84
    %s87 = sadd.s32 %s86, 1
    %p90 = scmp.eq.s32.totalorder %s14, 1
    %p91 = scmp.ne.s32.totalorder %s86, %s88
    %p92 = scmp.eq.s32.totalorder %s14, 0
    %p93 = por %p91, %p92
    %p94 = scmp.ne.s32.totalorder %s86, %s88
    %p95 = scmp.eq.s32.totalorder %s19, 1
    %p96 = por %p94, %p95
    %p97 = scmp.ne.s32.totalorder %s88, %s89
    %p98 = scmp.eq.s32.totalorder %s19, 0
    %p99 = por %p97, %p98
    %p100 = scmp.ne.s32.totalorder %s88, %s89
    %p101 = scmp.eq.s32.totalorder %s20, 1
    %p102 = por %p100, %p101
    %p104 = scmp.ne.s32.totalorder %s89, %s103
    %p105 = scmp.eq.s32.totalorder %s20, 0
    %p106 = por %p104, %p105
    %s107 = ssub.s32 %s21, %s33
    %p108 = scmp.eq.s32.totalorder %s107, 0
    %s110 = sadd.s32 %s109, 1
    %s111 = scalar_select %p108, %s109, %s110
    %p114 = pneg %p108
    %p115 = scmp.eq.s32.totalorder %s14, 1
    %p116 = por %p114, %p115
    %p117 = scmp.ne.s32.totalorder %s109, %s112
    %p118 = scmp.eq.s32.totalorder %s14, 0
    %p119 = por %p117, %p118
    %p120 = scmp.ne.s32.totalorder %s109, %s112
    %p121 = scmp.eq.s32.totalorder %s19, 1
    %p122 = por %p120, %p121
    %p123 = scmp.ne.s32.totalorder %s112, %s113
    %p124 = scmp.eq.s32.totalorder %s19, 0
    %p125 = por %p123, %p124
    %p126 = scmp.ne.s32.totalorder %s112, %s113
    %p127 = scmp.eq.s32.totalorder %s20, 1
    %p128 = por %p126, %p127
    %p130 = scmp.ne.s32.totalorder %s113, %s129
    %p131 = scmp.eq.s32.totalorder %s20, 0
    %p132 = por %p130, %p131
    %s133 = ssub.s32 %s21, %s33
    %p134 = scmp.eq.s32.totalorder %s133, 0
    %s136 = sadd.s32 %s135, 1
    %s137 = scalar_select %p134, %s135, %s136
    %p140 = pneg %p134
    %p141 = scmp.eq.s32.totalorder %s14, 1
    %p142 = por %p140, %p141
    %p143 = scmp.ne.s32.totalorder %s135, %s138
    %p144 = scmp.eq.s32.totalorder %s14, 0
    %p145 = por %p143, %p144
    %p146 = scmp.ne.s32.totalorder %s135, %s138
    %p147 = scmp.eq.s32.totalorder %s19, 1
    %p148 = por %p146, %p147
    %p149 = scmp.ne.s32.totalorder %s138, %s139
    %p150 = scmp.eq.s32.totalorder %s19, 0
    %p151 = por %p149, %p150
    %p152 = scmp.ne.s32.totalorder %s138, %s139
    %p153 = scmp.eq.s32.totalorder %s20, 1
    %p154 = por %p152, %p153
    %p156 = scmp.ne.s32.totalorder %s139, %s155
    %p157 = scmp.eq.s32.totalorder %s20, 0
    %p158 = por %p156, %p157
    %s159 = ssub.s32 %s22, %s29
    %s160 = ssub.s32 %s21, %s33
    %s161 = sor.u32 %s159, %s160
    %p162 = scmp.eq.s32.totalorder %s161, 0
    %s164 = sadd.s32 %s163, 1
    %s165 = scalar_select %p162, %s163, %s164
    %p168 = pneg %p162
    %p169 = scmp.eq.s32.totalorder %s14, 1
    %p170 = por %p168, %p169
    %p171 = scmp.ne.s32.totalorder %s163, %s166
    %p172 = scmp.eq.s32.totalorder %s14, 0
    %p173 = por %p171, %p172
    %p174 = scmp.ne.s32.totalorder %s163, %s166
    %p175 = scmp.eq.s32.totalorder %s19, 1
    %p176 = por %p174, %p175
    %p177 = scmp.ne.s32.totalorder %s166, %s167
    %p178 = scmp.eq.s32.totalorder %s19, 0
    %p179 = por %p177, %p178
    %p180 = scmp.ne.s32.totalorder %s166, %s167
    %p181 = scmp.eq.s32.totalorder %s20, 1
    %p182 = por %p180, %p181
    %p184 = scmp.ne.s32.totalorder %s167, %s183
    %p185 = scmp.eq.s32.totalorder %s20, 0
    %p186 = por %p184, %p185
    %s187 = ssub.s32 %s21, %s33
    %p188 = scmp.eq.s32.totalorder %s187, 0
    %s190 = sadd.s32 %s189, 1
    %s191 = scalar_select %p188, %s189, %s190
    %p194 = pneg %p188
    %p195 = scmp.eq.s32.totalorder %s14, 1
    %p196 = por %p194, %p195
    %p197 = scmp.ne.s32.totalorder %s189, %s192
    %p198 = scmp.eq.s32.totalorder %s14, 0
    %p199 = por %p197, %p198
    %p200 = scmp.ne.s32.totalorder %s189, %s192
    %p201 = scmp.eq.s32.totalorder %s19, 1
    %p202 = por %p200, %p201
    %p203 = scmp.ne.s32.totalorder %s192, %s193
    %p204 = scmp.eq.s32.totalorder %s19, 0
    %p205 = por %p203, %p204
    %p206 = scmp.ne.s32.totalorder %s192, %s193
    %p207 = scmp.eq.s32.totalorder %s20, 1
    %p208 = por %p206, %p207
    %p210 = scmp.ne.s32.totalorder %s193, %s209
    %p211 = scmp.eq.s32.totalorder %s20, 0
    %p212 = por %p210, %p211
    %s213 = ssub.s32 %s21, %s33
    %p214 = scmp.eq.s32.totalorder %s213, 0
    %s216 = sadd.s32 %s215, 1
    %s217 = scalar_select %p214, %s215, %s216
    %p220 = pneg %p214
    %p221 = scmp.eq.s32.totalorder %s14, 1
    %p222 = por %p220, %p221
    %p223 = scmp.ne.s32.totalorder %s215, %s218
    %p224 = scmp.eq.s32.totalorder %s14, 0
    %p225 = por %p223, %p224
    %p226 = scmp.ne.s32.totalorder %s215, %s218
    %p227 = scmp.eq.s32.totalorder %s19, 1
    %p228 = por %p226, %p227
    %p229 = scmp.ne.s32.totalorder %s218, %s219
    %p230 = scmp.eq.s32.totalorder %s19, 0
    %p231 = por %p229, %p230
    %p232 = scmp.ne.s32.totalorder %s218, %s219
    %p233 = scmp.eq.s32.totalorder %s20, 1
    %p234 = por %p232, %p233
    %p236 = scmp.ne.s32.totalorder %s219, %s235
    %p237 = scmp.eq.s32.totalorder %s20, 0
    %p238 = por %p236, %p237
    %p239 = scmp.le.s32.totalorder 1, %s14
    %p240 = scmp.lt.s32.totalorder %s14, 3
    %p241 = pnand %p239, %p240
    %p242 = pneg %p241
    // Predicated region
    $region9: #{cnn_block_forward.2} parent=5 // pred_check
      _
    $region10: #{cnn_block_forward.2} parent=5 // pred_check_branch
      %244 = sbr.rel (%p241) target = $region12
    $region11: #{cnn_block_forward.2} parent=5 // pred_region
      %s245 = ssub.s32 %s14, 1
      // Predicated region
      $region13: #{cnn_block_forward.2} parent=11 // pred_check
        %p246 = pneg %p78
      $region14: #{cnn_block_forward.2} parent=11 // pred_check_branch
        %248 = sbr.rel (%p246) target = $region16
      $region15: #{cnn_block_forward.2} parent=11 // pred_region
        %p249 = scmp.lt.s32.totalorder %s23, 0
        %s250 = scalar_select %p249, %s23, 0
        %s251 = smul.addr %s250, 4
        %s252 = scalar_lea.vmem %s1, %s251
      $region16: #{cnn_block_forward.2} parent=11 // pred_fallthru
        _
      // Predicated region
      $region17: #{cnn_block_forward.2} parent=11 // pred_check
        %p253 = pneg %p99
      $region18: #{cnn_block_forward.2} parent=11 // pred_check_branch
        %255 = sbr.rel (%p253) target = $region20
      $region19: #{cnn_block_forward.2} parent=11 // pred_region
        _
      $region20: #{cnn_block_forward.2} parent=11 // pred_fallthru
        _
      // Predicated region
      $region21: #{cnn_block_forward.2} parent=11 // pred_check
        %p256 = pneg %p125
      $region22: #{cnn_block_forward.2} parent=11 // pred_check_branch
        %258 = sbr.rel (%p256) target = $region24
      $region23: #{cnn_block_forward.2} parent=11 // pred_region
        %p259 = scmp.lt.s32.totalorder %s23, 0
        %s260 = scalar_select %p259, %s23, 0
        %s261 = scalar_lea.vmem %s3, %s260
      $region24: #{cnn_block_forward.2} parent=11 // pred_fallthru
        _
      // Predicated region
      $region25: #{cnn_block_forward.2} parent=11 // pred_check
        %p262 = pneg %p151
      $region26: #{cnn_block_forward.2} parent=11 // pred_check_branch
        %264 = sbr.rel (%p262) target = $region28
      $region27: #{cnn_block_forward.2} parent=11 // pred_region
        %p265 = scmp.lt.s32.totalorder %s23, 0
        %s266 = scalar_select %p265, %s23, 0
        %s267 = scalar_lea.vmem %s4, %s266
      $region28: #{cnn_block_forward.2} parent=11 // pred_fallthru
        _
    $region12: #{cnn_block_forward.2} parent=5 // pred_fallthru
      _
    %p268 = scmp.lt.s32.totalorder %s14, 2
    // Predicated region
    $region29: #{cnn_block_forward.2} parent=5 // pred_check
      %p269 = pneg %p268
    $region30: #{cnn_block_forward.2} parent=5 // pred_check_branch
      %271 = sbr.rel (%p269) target = $region32
    $region31: #{cnn_block_forward.2} parent=5 // pred_region
      // Predicated region
      $region33: #{cnn_block_forward.2} parent=31 // pred_check
        %p272 = pneg %p46
      $region34: #{cnn_block_forward.2} parent=31 // pred_check_branch
        %274 = sbr.rel (%p272) target = $region36
      $region35: #{cnn_block_forward.2} parent=31 // pred_region
        %p275 = scmp.lt.s32.totalorder %s22, 1
        %s276 = scalar_select %p275, %s22, 1
        %s277 = smul.addr %s276, 10
        %s278 = smul.addr %s277, 4
        %s279 = scalar_lea.vmem %s0, %s278
      $region36: #{cnn_block_forward.2} parent=31 // pred_fallthru
        _
    $region32: #{cnn_block_forward.2} parent=5 // pred_fallthru
      _
    %p280 = scmp.le.s32.totalorder 1, %s14
    %p281 = scmp.lt.s32.totalorder %s14, 3
    %p282 = pnand %p280, %p281
    %p283 = pneg %p282
    // Predicated region
    $region37: #{cnn_block_forward.2} parent=5 // pred_check
      _
    $region38: #{cnn_block_forward.2} parent=5 // pred_check_branch
      %285 = sbr.rel (%p282) target = $region40
    $region39: #{cnn_block_forward.2} parent=5 // pred_region
      %s286 = ssub.s32 %s14, 1
      %p287 = scmp.lt.s32.totalorder %s24, 1
      %s288 = scalar_select %p287, %s24, 1
      %s289 = smul.addr %s288, 10
      %s290 = smul.addr %s289, 4
      %s291 = scalar_lea.vmem %s0, %s290
      %p292 = pneg %p52
      %p293 = pneg %p49
      %p294 = scmp.lt.s32.totalorder %s23, 0
      %s295 = scalar_select %p294, %s23, 0
      %s296 = smul.addr %s295, 4
      %s297 = scalar_lea.vmem %s1, %s296
      %p298 = pneg %p78
      %p299 = pneg %p75
      %p300 = pneg %p99
      %p301 = pneg %p96
      %p302 = scmp.lt.s32.totalorder %s23, 0
      %s303 = scalar_select %p302, %s23, 0
      %s304 = scalar_lea.vmem %s3, %s303
      %p305 = pneg %p125
      %p306 = pneg %p122
      %p307 = scmp.lt.s32.totalorder %s23, 0
      %s308 = scalar_select %p307, %s23, 0
      %s309 = scalar_lea.vmem %s4, %s308
      %p310 = pneg %p151
      %p311 = pneg %p148
      %p312 = pneg %p179
      %p313 = pneg %p176
      %p314 = scmp.lt.s32.totalorder %s24, 1
      %s315 = scalar_select %p314, %s24, 1
      %p316 = scmp.lt.s32.totalorder %s23, 0
      %s317 = scalar_select %p316, %s23, 0
      %s318 = smul.addr %s315, 8
      %s319 = sadd.s32 %s317, %s318
      %s320 = smul.addr %s319, 4
      %s321 = scalar_lea.vmem %s5, %s320
      %p322 = pneg %p205
      %p323 = pneg %p202
      %p324 = scmp.lt.s32.totalorder %s23, 0
      %s325 = scalar_select %p324, %s23, 0
      %s326 = scalar_lea.vmem %s6, %s325
      %p327 = pneg %p231
      %p328 = pneg %p228
      %p329 = scmp.lt.s32.totalorder %s23, 0
      %s330 = scalar_select %p329, %s23, 0
      %s331 = scalar_lea.vmem %s7, %s330
      %p332 = scmp.lt.s32.totalorder %s24, 1
      %s333 = scalar_select %p332, %s24, 1
      %s334 = smul.addr %s333, 10
      %s335 = smul.addr %s334, 4
      %s336 = scalar_lea.vmem %s0, %s335
      %p337 = scmp.lt.s32.totalorder %s23, 0
      %s338 = scalar_select %p337, %s23, 0
      %s339 = smul.addr %s338, 4
      %s340 = scalar_lea.vmem %s1, %s339
      %p341 = scmp.lt.s32.totalorder %s23, 0
      %s342 = scalar_select %p341, %s23, 0
      %s343 = scalar_lea.vmem %s3, %s342
      %p344 = scmp.lt.s32.totalorder %s23, 0
      %s345 = scalar_select %p344, %s23, 0
      %s346 = scalar_lea.vmem %s4, %s345
      %p347 = scmp.lt.s32.totalorder %s24, 1
      %s348 = scalar_select %p347, %s24, 1
      %p349 = scmp.lt.s32.totalorder %s23, 0
      %s350 = scalar_select %p349, %s23, 0
      %s351 = smul.addr %s348, 8
      %s352 = sadd.s32 %s350, %s351
      %s353 = smul.addr %s352, 4
      %s354 = scalar_lea.vmem %s5, %s353
      %p355 = scmp.lt.s32.totalorder %s23, 0
      %s356 = scalar_select %p355, %s23, 0
      %s357 = scalar_lea.vmem %s6, %s356
      %p358 = scmp.lt.s32.totalorder %s23, 0
      %s359 = scalar_select %p358, %s23, 0
      %s360 = scalar_lea.vmem %s7, %s359
      %v362 = vld [vmem:[%s336] sm:$0xf]
      %v363 = vld [vmem:[%s336 + $0x4] sm:$0xf]
      %v364 = vld [vmem:[%s336 + $0x8] sm:$0xf]
      %v365 = vld [vmem:[%s336 + $0xc] sm:$0xf]
      %v366 = vld [vmem:[%s336 + $0x10] sm:$0xf]
      %v367 = vld [vmem:[%s336 + $0x14] sm:$0xf]
      %v368 = vld [vmem:[%s336 + $0x18] sm:$0xf]
      %v369 = vld [vmem:[%s336 + $0x1c] sm:$0xf]
      %v370 = vld [vmem:[%s340] sm:$0xf]
      %v371 = vld [vmem:[%s340 + $0x4] sm:$0xf]
      %v372 = vld [vmem:[%s336 + $0x20] sm:$0x1]
      %s373 = scalar_lea.vmem %s340, 8
      %v374 = vld [vmem:[%s373] sm:$0xf]
      %v375 = vld [vmem:[%s373 + $0x4] sm:$0xf]
      %v385 = vunpack.c.l.b16 %v362
      %v386 = vunpack.c.l.b16 %v363
      %v387 = vunpack.c.l.b16 %v364
      %v388 = vunpack.c.l.b16 %v365
      %v389 = vunpack.c.l.b16 %v366
      %v390 = vunpack.c.l.b16 %v367
      %v391 = vunpack.c.l.b16 %v368
      %v392 = vunpack.c.l.b16 %v369
      %v393 = vunpack.c.l.b16 %v372
      %v394 = vpack.c.b16 %v386, %v385
      %v395 = vpack.c.b16 %v388, %v387
      %v396 = vpack.c.b16 %v390, %v389
      %v397 = vpack.c.b16 %v392, %v391
      %v398 = vpack.c.b16 %v393, %v393
      %vm399 = vsmask.f32 7424
      %v401 = vshrl.u32 %v394, 16
      %v403 = vshll.u32 %v394, 16
      %v405 = vrot.slane %v403, 1
      %v406 = vor.u32 %v401, %v405
      %v408 = vshll.u32 %v395, 16
      %v410 = vrot.slane %v408, 1
      %v411 = vsel %vm399, %v406, %v410
      %v412 = vshrl.u32 %v395, 16
      %v414 = vor.u32 %v412, %v410
      %v416 = vshll.u32 %v396, 16
      %v418 = vrot.slane %v416, 1
      %v419 = vsel %vm399, %v414, %v418
      %v420 = vshrl.u32 %v396, 16
      %v422 = vor.u32 %v420, %v418
      %v424 = vshll.u32 %v397, 16
      %v426 = vrot.slane %v424, 1
      %v427 = vsel %vm399, %v422, %v426
      %v428 = vshrl.u32 %v397, 16
      %v430 = vor.u32 %v428, %v426
      %v432 = vshll.u32 %v398, 16
      %v434 = vrot.slane %v432, 1
      %v435 = vsel %vm399, %v430, %v434
      %v438 = vunpack.c.l.b16 %v374
      %v439 = vunpack.c.l.b16 %v375
      %v440 = vpack.c.b16 %v439, %v438
      %vm442 = vcmask 130048
      %v444 = vsel %vm442, %v411, 0
      %v447 = vsel %vm442, %v419, 0
      %v450 = vsel %vm442, %v427, 0
      %v453 = vsel %vm442, %v435, 0
      %455 = vmatprep.subr.bf16.mxu0 0
      %456 = vmatpush1.bf16.msra.mxu0 %v440
      %457 = vmatprep.subr.bf16.mxu0 0
      %458 = vmatpush1.bf16.msra.mxu0 0
      %459 = vmatprep.subr.bf16.mxu0 0
      %460 = vmatpush1.bf16.msra.mxu0 0
      %461 = vmatprep.subr.bf16.mxu0 0
      %462 = vmatpush1.bf16.msra.mxu0 0
      %463 = vmatprep.subr.bf16.mxu0 0
      %464 = vmatpush1.bf16.msra.mxu0 0
      %465 = vmatprep.subr.bf16.mxu0 0
      %466 = vmatpush1.bf16.msra.mxu0 0
      %467 = vmatprep.subr.bf16.mxu0 0
      %468 = vmatpush1.bf16.msra.mxu0 0
      %469 = vmatprep.subr.bf16.mxu0 0
      %470 = vmatpush1.bf16.msra.mxu0 0
      %471 = vmatprep.subr.bf16.mxu0 0
      %472 = vmatpush1.bf16.msra.mxu0 0
      %473 = vmatprep.subr.bf16.mxu0 0
      %474 = vmatpush1.bf16.msra.mxu0 0
      %475 = vmatprep.subr.bf16.mxu0 0
      %476 = vmatpush1.bf16.msra.mxu0 0
      %477 = vmatprep.subr.bf16.mxu0 0
      %478 = vmatpush1.bf16.msra.mxu0 0
      %479 = vmatprep.subr.bf16.mxu0 0
      %480 = vmatpush1.bf16.msra.mxu0 0
      %481 = vmatprep.subr.bf16.mxu0 0
      %482 = vmatpush1.bf16.msra.mxu0 0
      %483 = vmatprep.subr.bf16.mxu0 0
      %484 = vmatpush1.bf16.msra.mxu0 0
      %485 = vmatprep.subr.bf16.mxu0 0
      %486 = vmatpush1.bf16.msra.mxu0 0
      %487 = vmatprep.mubr.bf16.mxu0 0
      %488 = vmatmul.mubr.bf16.gmra.mrb[0].mxu0 %v444
      %v489 = vpop.f32.mrb[0].mxu0
      %v490 = vadd.f32 0.0, %v489
      %v491 = vpop.f32.mrb[0].mxu0
      %v492 = vpop.f32.mrb[0].mxu0
      %v493 = vadd.f32 0.0, %v492
      %v494 = vpop.f32.mrb[0].mxu0
      %495 = vmatprep.mubr.bf16.mxu0 0
      %496 = vmatmul.mubr.bf16.gmra.mrb[0].mxu0 %v447
      %v497 = vpop.f32.mrb[0].mxu0
      %v498 = vadd.f32 0.0, %v497
      %v499 = vpop.f32.mrb[0].mxu0
      %v500 = vpop.f32.mrb[0].mxu0
      %v501 = vadd.f32 0.0, %v500
      %v502 = vpop.f32.mrb[0].mxu0
      %503 = vmatprep.mubr.bf16.mxu0 0
      %504 = vmatmul.mubr.bf16.gmra.mrb[0].mxu0 %v450
      %v505 = vpop.f32.mrb[0].mxu0
      %v506 = vadd.f32 0.0, %v505
      %v507 = vpop.f32.mrb[0].mxu0
      %v508 = vpop.f32.mrb[0].mxu0
      %v509 = vadd.f32 0.0, %v508
      %v510 = vpop.f32.mrb[0].mxu0
      %511 = vmatprep.mubr.bf16.mxu0 0
      %512 = vmatmul.mubr.bf16.gmra.mrb[0].mxu0 %v453
      %v513 = vpop.f32.mrb[0].mxu0
      %v514 = vadd.f32 0.0, %v513
      %v515 = vpop.f32.mrb[0].mxu0
      %v516 = vpop.f32.mrb[0].mxu0
      %v517 = vadd.f32 0.0, %v516
      %v518 = vpop.f32.mrb[0].mxu0
      %519 = vdwg.mxu0
      %v522 = vunpack.c.l.b16 %v370
      %v523 = vunpack.c.l.b16 %v371
      %v524 = vpack.c.b16 %v523, %v522
      %v526 = vsel %vm442, %v394, 0
      %v528 = vsel %vm442, %v395, 0
      %v530 = vsel %vm442, %v396, 0
      %v532 = vsel %vm442, %v397, 0
      %534 = vmatprep.subr.bf16.mxu0 0
      %535 = vmatpush1.bf16.msra.mxu0 %v524
      %536 = vmatprep.subr.bf16.mxu0 0
      %537 = vmatpush1.bf16.msra.mxu0 0
      %538 = vmatprep.subr.bf16.mxu0 0
      %539 = vmatpush1.bf16.msra.mxu0 0
      %540 = vmatprep.subr.bf16.mxu0 0
      %541 = vmatpush1.bf16.msra.mxu0 0
      %542 = vmatprep.subr.bf16.mxu0 0
      %543 = vmatpush1.bf16.msra.mxu0 0
      %544 = vmatprep.subr.bf16.mxu0 0
      %545 = vmatpush1.bf16.msra.mxu0 0
      %546 = vmatprep.subr.bf16.mxu0 0
      %547 = vmatpush1.bf16.msra.mxu0 0
      %548 = vmatprep.subr.bf16.mxu0 0
      %549 = vmatpush1.bf16.msra.mxu0 0
      %550 = vmatprep.subr.bf16.mxu0 0
      %551 = vmatpush1.bf16.msra.mxu0 0
      %552 = vmatprep.subr.bf16.mxu0 0
      %553 = vmatpush1.bf16.msra.mxu0 0
      %554 = vmatprep.subr.bf16.mxu0 0
      %555 = vmatpush1.bf16.msra.mxu0 0
      %556 = vmatprep.subr.bf16.mxu0 0
      %557 = vmatpush1.bf16.msra.mxu0 0
      %558 = vmatprep.subr.bf16.mxu0 0
      %559 = vmatpush1.bf16.msra.mxu0 0
      %560 = vmatprep.subr.bf16.mxu0 0
      %561 = vmatpush1.bf16.msra.mxu0 0
      %562 = vmatprep.subr.bf16.mxu0 0
      %563 = vmatpush1.bf16.msra.mxu0 0
      %564 = vmatprep.subr.bf16.mxu0 0
      %565 = vmatpush1.bf16.msra.mxu0 0
      %566 = vmatprep.mubr.bf16.mxu0 0
      %567 = vmatmul.mubr.bf16.gmra.mrb[0].mxu0 %v526
      %v568 = vpop.f32.mrb[0].mxu0
      %v569 = vadd.f32 %v490, %v568
      %v570 = vpop.f32.mrb[0].mxu0
      %v571 = vpop.f32.mrb[0].mxu0
      %v572 = vadd.f32 %v493, %v571
      %v573 = vpop.f32.mrb[0].mxu0
      %574 = vmatprep.mubr.bf16.mxu0 0
      %575 = vmatmul.mubr.bf16.gmra.mrb[0].mxu0 %v528
      %v576 = vpop.f32.mrb[0].mxu0
      %v577 = vadd.f32 %v498, %v576
      %v578 = vpop.f32.mrb[0].mxu0
      %v579 = vpop.f32.mrb[0].mxu0
      %v580 = vadd.f32 %v501, %v579
      %v581 = vpop.f32.mrb[0].mxu0
      %582 = vmatprep.mubr.bf16.mxu0 0
      %583 = vmatmul.mubr.bf16.gmra.mrb[0].mxu0 %v530
      %v584 = vpop.f32.mrb[0].mxu0
      %v585 = vadd.f32 %v506, %v584
      %v586 = vpop.f32.mrb[0].mxu0
      %v587 = vpop.f32.mrb[0].mxu0
      %v588 = vadd.f32 %v509, %v587
      %v589 = vpop.f32.mrb[0].mxu0
      %590 = vmatprep.mubr.bf16.mxu0 0
      %591 = vmatmul.mubr.bf16.gmra.mrb[0].mxu0 %v532
      %v592 = vpop.f32.mrb[0].mxu0
      %v593 = vadd.f32 %v514, %v592
      %v594 = vpop.f32.mrb[0].mxu0
      %v595 = vpop.f32.mrb[0].mxu0
      %v596 = vadd.f32 %v517, %v595
      %v597 = vpop.f32.mrb[0].mxu0
      %598 = vdwg.mxu0
      %v599 = vld [vmem:[%s336 + $0x20] sm:$0xf]
      %s600 = scalar_lea.vmem %s340, 16
      %v601 = vld [vmem:[%s600] sm:$0xf]
      %v602 = vld [vmem:[%s600 + $0x4] sm:$0xf]
      %v604 = vunpack.c.l.b16 %v599
      %v605 = vpack.c.b16 %v387, %v386
      %v606 = vpack.c.b16 %v389, %v388
      %v607 = vpack.c.b16 %v391, %v390
      %v608 = vpack.c.b16 %v604, %v392
      %v611 = vunpack.c.l.b16 %v601
      %v612 = vunpack.c.l.b16 %v602
      %v613 = vpack.c.b16 %v612, %v611
      %v616 = vsel %vm442, %v605, 0
      %v619 = vsel %vm442, %v606, 0
      %v622 = vsel %vm442, %v607, 0
      %v625 = vsel %vm442, %v608, 0
      %627 = vmatprep.subr.bf16.mxu0 0
      %628 = vmatpush1.bf16.msra.mxu0 %v613
      %629 = vmatprep.subr.bf16.mxu0 0
      %630 = vmatpush1.bf16.msra.mxu0 0
      %631 = vmatprep.subr.bf16.mxu0 0
      %632 = vmatpush1.bf16.msra.mxu0 0
      %633 = vmatprep.subr.bf16.mxu0 0
      %634 = vmatpush1.bf16.msra.mxu0 0
      %635 = vmatprep.subr.bf16.mxu0 0
      %636 = vmatpush1.bf16.msra.mxu0 0
      %637 = vmatprep.subr.bf16.mxu0 0
      %638 = vmatpush1.bf16.msra.mxu0 0
      %639 = vmatprep.subr.bf16.mxu0 0
      %640 = vmatpush1.bf16.msra.mxu0 0
      %641 = vmatprep.subr.bf16.mxu0 0
      %642 = vmatpush1.bf16.msra.mxu0 0
      %643 = vmatprep.subr.bf16.mxu0 0
      %644 = vmatpush1.bf16.msra.mxu0 0
      %645 = vmatprep.subr.bf16.mxu0 0
      %646 = vmatpush1.bf16.msra.mxu0 0
      %647 = vmatprep.subr.bf16.mxu0 0
      %648 = vmatpush1.bf16.msra.mxu0 0
      %649 = vmatprep.subr.bf16.mxu0 0
      %650 = vmatpush1.bf16.msra.mxu0 0
      %651 = vmatprep.subr.bf16.mxu0 0
      %652 = vmatpush1.bf16.msra.mxu0 0
      %653 = vmatprep.subr.bf16.mxu0 0
      %654 = vmatpush1.bf16.msra.mxu0 0
      %655 = vmatprep.subr.bf16.mxu0 0
      %656 = vmatpush1.bf16.msra.mxu0 0
      %657 = vmatprep.subr.bf16.mxu0 0
      %658 = vmatpush1.bf16.msra.mxu0 0
      %659 = vmatprep.mubr.bf16.mxu0 0
      %660 = vmatmul.mubr.bf16.gmra.mrb[0].mxu0 %v616
      %v661 = vpop.f32.mrb[0].mxu0
      %v662 = vadd.f32 0.0, %v661
      %v663 = vpop.f32.mrb[0].mxu0
      %v664 = vpop.f32.mrb[0].mxu0
      %v665 = vadd.f32 0.0, %v664
      %v666 = vpop.f32.mrb[0].mxu0
      %667 = vmatprep.mubr.bf16.mxu0 0
      %668 = vmatmul.mubr.bf16.gmra.mrb[0].mxu0 %v619
      %v669 = vpop.f32.mrb[0].mxu0
      %v670 = vadd.f32 0.0, %v669
      %v671 = vpop.f32.mrb[0].mxu0
      %v672 = vpop.f32.mrb[0].mxu0
      %v673 = vadd.f32 0.0, %v672
      %v674 = vpop.f32.mrb[0].mxu0
      %675 = vmatprep.mubr.bf16.mxu0 0
      %676 = vmatmul.mubr.bf16.gmra.mrb[0].mxu0 %v622
      %v677 = vpop.f32.mrb[0].mxu0
      %v678 = vadd.f32 0.0, %v677
      %v679 = vpop.f32.mrb[0].mxu0
      %v680 = vpop.f32.mrb[0].mxu0
      %v681 = vadd.f32 0.0, %v680
      %v682 = vpop.f32.mrb[0].mxu0
      %683 = vmatprep.mubr.bf16.mxu0 0
      %684 = vmatmul.mubr.bf16.gmra.mrb[0].mxu0 %v625
      %v685 = vpop.f32.mrb[0].mxu0
      %v686 = vadd.f32 0.0, %v685
      %v687 = vpop.f32.mrb[0].mxu0
      %v688 = vpop.f32.mrb[0].mxu0
      %v689 = vadd.f32 0.0, %v688
      %v690 = vpop.f32.mrb[0].mxu0
      %691 = vdwg.mxu0
      %v692 = vadd.f32 %v569, %v662
      %v693 = vadd.f32 %v572, %v665
      %v694 = vadd.f32 %v577, %v670
      %v695 = vadd.f32 %v580, %v673
      %v696 = vadd.f32 %v585, %v678
      %v697 = vadd.f32 %v588, %v681
      %v698 = vadd.f32 %v593, %v686
      %v699 = vadd.f32 %v596, %v689
      %v700 = vld [vmem:[%s336 + $0x4] sm:$0xf]
      %v701 = vld [vmem:[%s336 + $0x8] sm:$0xf]
      %v702 = vld [vmem:[%s336 + $0xc] sm:$0xf]
      %v703 = vld [vmem:[%s336 + $0x10] sm:$0xf]
      %v704 = vld [vmem:[%s336 + $0x14] sm:$0xf]
      %v705 = vld [vmem:[%s336 + $0x18] sm:$0xf]
      %v706 = vld [vmem:[%s336 + $0x1c] sm:$0xf]
      %v707 = vld [vmem:[%s336 + $0x20] sm:$0xf]
      %v708 = vld [vmem:[%s336 + $0x24] sm:$0x1]
      %s709 = scalar_lea.vmem %s340, 24
      %v710 = vld [vmem:[%s709] sm:$0xf]
      %v711 = vld [vmem:[%s709 + $0x4] sm:$0xf]
      %v721 = vunpack.c.l.b16 %v700
      %v722 = vunpack.c.l.b16 %v701
      %v723 = vunpack.c.l.b16 %v702
      %v724 = vunpack.c.l.b16 %v703
      %v725 = vunpack.c.l.b16 %v704
      %v726 = vunpack.c.l.b16 %v705
      %v727 = vunpack.c.l.b16 %v706
      %v728 = vunpack.c.l.b16 %v707
      %v729 = vunpack.c.l.b16 %v708
      %v730 = vpack.c.b16 %v722, %v721
      %v731 = vpack.c.b16 %v724, %v723
      %v732 = vpack.c.b16 %v726, %v725
      %v733 = vpack.c.b16 %v728, %v727
      %v734 = vpack.c.b16 %v729, %v729
      %v736 = vshrl.u32 %v730, 16
      %v738 = vshll.u32 %v730, 16
      %v740 = vrot.slane %v738, 1
      %v741 = vor.u32 %v736, %v740
      %v743 = vshll.u32 %v731, 16
      %v745 = vrot.slane %v743, 1
      %v746 = vsel %vm399, %v741, %v745
      %v747 = vshrl.u32 %v731, 16
      %v749 = vor.u32 %v747, %v745
      %v751 = vshll.u32 %v732, 16
      %v753 = vrot.slane %v751, 1
      %v754 = vsel %vm399, %v749, %v753
      %v755 = vshrl.u32 %v732, 16
      %v757 = vor.u32 %v755, %v753
      %v759 = vshll.u32 %v733, 16
      %v761 = vrot.slane %v759, 1
      %v762 = vsel %vm399, %v757, %v761
      %v763 = vshrl.u32 %v733, 16
      %v765 = vor.u32 %v763, %v761
      %v767 = vshll.u32 %v734, 16
      %v769 = vrot.slane %v767, 1
      %v770 = vsel %vm399, %v765, %v769
      %v773 = vunpack.c.l.b16 %v710
      %v774 = vunpack.c.l.b16 %v711
      %v775 = vpack.c.b16 %v774, %v773
      %v778 = vsel %vm442, %v746, 0
      %v781 = vsel %vm442, %v754, 0
      %v784 = vsel %vm442, %v762, 0
      %v787 = vsel %vm442, %v770, 0
      %789 = vmatprep.subr.bf16.mxu0 0
      %790 = vmatpush1.bf16.msra.mxu0 %v775
      %791 = vmatprep.subr.bf16.mxu0 0
      %792 = vmatpush1.bf16.msra.mxu0 0
      %793 = vmatprep.subr.bf16.mxu0 0
      %794 = vmatpush1.bf16.msra.mxu0 0
      %795 = vmatprep.subr.bf16.mxu0 0
      %796 = vmatpush1.bf16.msra.mxu0 0
      %797 = vmatprep.subr.bf16.mxu0 0
      %798 = vmatpush1.bf16.msra.mxu0 0
      %799 = vmatprep.subr.bf16.mxu0 0
      %800 = vmatpush1.bf16.msra.mxu0 0
      %801 = vmatprep.subr.bf16.mxu0 0
      %802 = vmatpush1.bf16.msra.mxu0 0
      %803 = vmatprep.subr.bf16.mxu0 0
      %804 = vmatpush1.bf16.msra.mxu0 0
      %805 = vmatprep.subr.bf16.mxu0 0
      %806 = vmatpush1.bf16.msra.mxu0 0
      %807 = vmatprep.subr.bf16.mxu0 0
      %808 = vmatpush1.bf16.msra.mxu0 0
      %809 = vmatprep.subr.bf16.mxu0 0
      %810 = vmatpush1.bf16.msra.mxu0 0
      %811 = vmatprep.subr.bf16.mxu0 0
      %812 = vmatpush1.bf16.msra.mxu0 0
      %813 = vmatprep.subr.bf16.mxu0 0
      %814 = vmatpush1.bf16.msra.mxu0 0
      %815 = vmatprep.subr.bf16.mxu0 0
      %816 = vmatpush1.bf16.msra.mxu0 0
      %817 = vmatprep.subr.bf16.mxu0 0
      %818 = vmatpush1.bf16.msra.mxu0 0
      %819 = vmatprep.subr.bf16.mxu0 0
      %820 = vmatpush1.bf16.msra.mxu0 0
      %821 = vmatprep.mubr.bf16.mxu0 0
      %822 = vmatmul.mubr.bf16.gmra.mrb[0].mxu0 %v778
      %v823 = vpop.f32.mrb[0].mxu0
      %v824 = vadd.f32 0.0, %v823
      %v825 = vpop.f32.mrb[0].mxu0
      %v826 = vpop.f32.mrb[0].mxu0
      %v827 = vadd.f32 0.0, %v826
      %v828 = vpop.f32.mrb[0].mxu0
      %829 = vmatprep.mubr.bf16.mxu0 0
      %830 = vmatmul.mubr.bf16.gmra.mrb[0].mxu0 %v781
      %v831 = vpop.f32.mrb[0].mxu0
      %v832 = vadd.f32 0.0, %v831
      %v833 = vpop.f32.mrb[0].mxu0
      %v834 = vpop.f32.mrb[0].mxu0
      %v835 = vadd.f32 0.0, %v834
      %v836 = vpop.f32.mrb[0].mxu0
      %837 = vmatprep.mubr.bf16.mxu0 0
      %838 = vmatmul.mubr.bf16.gmra.mrb[0].mxu0 %v784
      %v839 = vpop.f32.mrb[0].mxu0
      %v840 = vadd.f32 0.0, %v839
      %v841 = vpop.f32.mrb[0].mxu0
      %v842 = vpop.f32.mrb[0].mxu0
      %v843 = vadd.f32 0.0, %v842
      %v844 = vpop.f32.mrb[0].mxu0
      %845 = vmatprep.mubr.bf16.mxu0 0
      %846 = vmatmul.mubr.bf16.gmra.mrb[0].mxu0 %v787
      %v847 = vpop.f32.mrb[0].mxu0
      %v848 = vadd.f32 0.0, %v847
      %v849 = vpop.f32.mrb[0].mxu0
      %v850 = vpop.f32.mrb[0].mxu0
      %v851 = vadd.f32 0.0, %v850
      %v852 = vpop.f32.mrb[0].mxu0
      %853 = vdwg.mxu0
      %v854 = vadd.f32 %v692, %v824
      %v855 = vadd.f32 %v693, %v827
      %v856 = vadd.f32 %v694, %v832
      %v857 = vadd.f32 %v695, %v835
      %v858 = vadd.f32 %v696, %v840
      %v859 = vadd.f32 %v697, %v843
      %v860 = vadd.f32 %v698, %v848
      %v861 = vadd.f32 %v699, %v851
      %v862 = vld [vmem:[%s2] sm:$0xff]
      %v863 = vld [vmem:[%s2 + $0x8] sm:$0xff]
      %v864 = vld [vmem:[%s2 + $0x10] sm:$0xff]
      %v865 = vld [vmem:[%s2 + $0x18] sm:$0xff]
      %v866 = vld [vmem:[%s2 + $0x20] sm:$0xff]
      %v867 = vld [vmem:[%s2 + $0x28] sm:$0xff]
      %v868 = vld [vmem:[%s2 + $0x30] sm:$0xff]
      %v869 = vld [vmem:[%s2 + $0x38] sm:$0xff]
      %871 = vset.pattern.permute.xlu0 0
      %872 = vperm.xlu0 %871, %v862
      %v873 = vpop.permute.xlu0 %872
      %876 = vset.pattern.permute.xlu0 0
      %877 = vperm.xlu0 %876, %v863
      %v878 = vpop.permute.xlu0 %877
      %881 = vset.pattern.permute.xlu0 0
      %882 = vperm.xlu0 %881, %v864
      %v883 = vpop.permute.xlu0 %882
      %886 = vset.pattern.permute.xlu0 0
      %887 = vperm.xlu0 %886, %v865
      %v888 = vpop.permute.xlu0 %887
      %891 = vset.pattern.permute.xlu0 0
      %892 = vperm.xlu0 %891, %v866
      %v893 = vpop.permute.xlu0 %892
      %896 = vset.pattern.permute.xlu0 0
      %897 = vperm.xlu0 %896, %v867
      %v898 = vpop.permute.xlu0 %897
      %901 = vset.pattern.permute.xlu0 0
      %902 = vperm.xlu0 %901, %v868
      %v903 = vpop.permute.xlu0 %902
      %906 = vset.pattern.permute.xlu0 0
      %907 = vperm.xlu0 %906, %v869
      %v908 = vpop.permute.xlu0 %907
      %v910 = vmul.f32 %v854, %v873
      %v911 = vmul.f32 %v855, %v878
      %v912 = vmul.f32 %v856, %v883
      %v913 = vmul.f32 %v857, %v888
      %v914 = vmul.f32 %v858, %v893
      %v915 = vmul.f32 %v859, %v898
      %v916 = vmul.f32 %v860, %v903
      %v917 = vmul.f32 %v861, %v908
      %p918 = scmp.eq.s32.totalorder %s24, 0
      // Predicated region
      $region41: #{cnn_block_forward.2} parent=39 // pred_check
        %p919 = pneg %p918
      $region42: #{cnn_block_forward.2} parent=39 // pred_check_branch
        %921 = sbr.rel (%p919) target = $region44
      $region43: #{cnn_block_forward.2} parent=39 // pred_region
        %922 = vst [vmem:[#allocation2] sm:$0x1] 0.0
        %923 = vst [vmem:[#allocation3] sm:$0x1] 0.0
        %v924 = vadd.f32 %v910, %v911
        %v925 = vadd.f32 %v924, %v912
        %v926 = vadd.f32 %v925, %v913
        %v927 = vadd.f32 %v926, %v914
        %v928 = vadd.f32 %v927, %v915
        %v929 = vadd.f32 %v928, %v916
        %v930 = vadd.f32 %v929, %v917
        %v931 = vrot.slane %v930, 4
        %v932 = vadd.f32 %v930, %v931
        %v933 = vrot.slane %v932, 2
        %v934 = vadd.f32 %v932, %v933
        %v935 = vrot.slane %v934, 1
        %v936 = vadd.f32 %v934, %v935
        %v937 = vmul.f32 %v936, 0.020408163
        %938 = vst [vmem:[#allocation4] sm:$0x1] %v937
      $region44: #{cnn_block_forward.2} parent=39 // pred_fallthru
        _
      %v939 = vld [vmem:[#allocation4] sm:$0x1]
      %v941 = vlaneseq
      %v942 = vshrl.u32 %v941, 7
      %v943 = vsub.s32 0, %v942
      %v944 = vrot.slane %v939, %v943
      %v946 = vsub.f32 %v854, %v944
      %v947 = vsub.f32 %v855, %v944
      %v948 = vsub.f32 %v856, %v944
      %v949 = vsub.f32 %v857, %v944
      %v950 = vsub.f32 %v858, %v944
      %v951 = vsub.f32 %v859, %v944
      %v952 = vsub.f32 %v860, %v944
      %v953 = vsub.f32 %v861, %v944
      %v954 = vmul.f32 %v946, %v873
      %v955 = vmul.f32 %v947, %v878
      %v956 = vmul.f32 %v948, %v883
      %v957 = vmul.f32 %v949, %v888
      %v958 = vmul.f32 %v950, %v893
      %v959 = vmul.f32 %v951, %v898
      %v960 = vmul.f32 %v952, %v903
      %v961 = vmul.f32 %v953, %v908
      %v962 = vld [vmem:[#allocation2] sm:$0x1]
      %v963 = vadd.f32 %v954, %v955
      %v964 = vadd.f32 %v963, %v956
      %v965 = vadd.f32 %v964, %v957
      %v966 = vadd.f32 %v965, %v958
      %v967 = vadd.f32 %v966, %v959
      %v968 = vadd.f32 %v967, %v960
      %v969 = vadd.f32 %v968, %v961
      %v970 = vrot.slane %v969, 4
      %v971 = vadd.f32 %v969, %v970
      %v972 = vrot.slane %v971, 2
      %v973 = vadd.f32 %v971, %v972
      %v974 = vrot.slane %v973, 1
      %v975 = vadd.f32 %v973, %v974
      %v976 = vadd.f32 %v962, %v975
      %977 = vst [vmem:[#allocation2] sm:$0x1] %v976
      %v978 = vld [vmem:[#allocation3] sm:$0x1]
      %v979 = vmul.f32 %v954, %v954
      %v980 = vmul.f32 %v955, %v955
      %v981 = vmul.f32 %v956, %v956
      %v982 = vmul.f32 %v957, %v957
      %v983 = vmul.f32 %v958, %v958
      %v984 = vmul.f32 %v959, %v959
      %v985 = vmul.f32 %v960, %v960
      %v986 = vmul.f32 %v961, %v961
      %v987 = vadd.f32 %v979, %v980
      %v988 = vadd.f32 %v987, %v981
      %v989 = vadd.f32 %v988, %v982
      %v990 = vadd.f32 %v989, %v983
      %v991 = vadd.f32 %v990, %v984
      %v992 = vadd.f32 %v991, %v985
      %v993 = vadd.f32 %v992, %v986
      %v994 = vrot.slane %v993, 4
      %v995 = vadd.f32 %v993, %v994
      %v996 = vrot.slane %v995, 2
      %v997 = vadd.f32 %v995, %v996
      %v998 = vrot.slane %v997, 1
      %v999 = vadd.f32 %v997, %v998
      %v1000 = vadd.f32 %v978, %v999
      %1001 = vst [vmem:[#allocation3] sm:$0x1] %v1000
      %v1002 = vpack.c.bf16 %v911, %v910
      %v1003 = vpack.c.bf16 %v913, %v912
      %v1004 = vpack.c.bf16 %v915, %v914
      %v1005 = vpack.c.bf16 %v917, %v916
      %v1010 = vunpack.c.l.b16 %v1002
      %v1011 = vunpack.c.h.b16 %v1002
      %v1012 = vunpack.c.l.b16 %v1003
      %v1013 = vunpack.c.h.b16 %v1003
      %v1014 = vunpack.c.l.b16 %v1004
      %v1015 = vunpack.c.h.b16 %v1004
      %v1016 = vunpack.c.l.b16 %v1005
      %v1017 = vunpack.c.h.b16 %v1005
      %v1018 = vpack.c.b16 %v1010, %v1010
      %v1019 = vpack.c.b16 %v1011, %v1011
      %v1020 = vpack.c.b16 %v1012, %v1012
      %v1021 = vpack.c.b16 %v1013, %v1013
      %v1022 = vpack.c.b16 %v1014, %v1014
      %v1023 = vpack.c.b16 %v1015, %v1015
      %v1024 = vpack.c.b16 %v1016, %v1016
      %v1025 = vpack.c.b16 %v1017, %v1017
      %1034 = vst [vmem:[%s354] sm:$0xf] %v1018
      %1035 = vst [vmem:[%s354 + $0x4] sm:$0xf] %v1019
      %1036 = vst [vmem:[%s354 + $0x8] sm:$0xf] %v1020
      %1037 = vst [vmem:[%s354 + $0xc] sm:$0xf] %v1021
      %1038 = vst [vmem:[%s354 + $0x10] sm:$0xf] %v1022
      %1039 = vst [vmem:[%s354 + $0x14] sm:$0xf] %v1023
      %1040 = vst [vmem:[%s354 + $0x18] sm:$0xf] %v1024
      %1041 = vst [vmem:[%s354 + $0x1c] sm:$0xf] %v1025
      %p1042 = scmp.eq.s32.totalorder %s24, 1
      // Predicated region
      $region45: #{cnn_block_forward.2} parent=39 // pred_check
        %p1043 = pneg %p1042
      $region46: #{cnn_block_forward.2} parent=39 // pred_check_branch
        %1045 = sbr.rel (%p1043) target = $region48
      $region47: #{cnn_block_forward.2} parent=39 // pred_region
        %v1046 = vld [vmem:[#allocation2] sm:$0x1]
        %v1047 = vmul.f32 %v1046, 0.010204081
        %v1048 = vld [vmem:[#allocation4] sm:$0x1]
        %v1049 = vadd.f32 %v1048, %v1047
        %v1050 = vld [vmem:[#allocation3] sm:$0x1]
        %v1051 = vmul.f32 %v1050, 0.010204081
        %v1052 = vmul.f32 %v1047, %v1047
        %v1053 = vsub.f32 %v1051, %v1052
        %v1054 = vmax.f32 %v1053, 0.0
        %v1055 = vld [vmem:[%s343] sm:$0x1]
        %v1056 = vadd.f32 %v1054, 1e-05
        %v1057 = vrsqrt.pop %v1056
        %v1058 = vmul.f32 %v1055, %v1057
        %1059 = vst [vmem:[%s357] sm:$0x1] %v1058
        %v1060 = vld [vmem:[%s346] sm:$0x1]
        %v1061 = vmul.f32 %v1049, %v1058
        %v1062 = vsub.f32 %v1060, %v1061
        %1063 = vst [vmem:[%s360] sm:$0x1] %v1062
      $region48: #{cnn_block_forward.2} parent=39 // pred_fallthru
        _
      %p1064 = scmp.lt.s32.totalorder %s24, 1
      %s1065 = scalar_select %p1064, %s24, 1
      %p1066 = scmp.lt.s32.totalorder %s23, 0
      %s1067 = scalar_select %p1066, %s23, 0
      %s1068 = smul.addr %s1065, 8
      %s1069 = sadd.s32 %s1067, %s1068
      %s1070 = smul.addr %s1069, 4
      %s1071 = scalar_lea.vmem %s5, %s1070
      %p1072 = scmp.lt.s32.totalorder %s23, 0
      %s1073 = scalar_select %p1072, %s23, 0
      %s1074 = scalar_lea.vmem %s6, %s1073
      %p1075 = scmp.lt.s32.totalorder %s23, 0
      %s1076 = scalar_select %p1075, %s23, 0
      %s1077 = scalar_lea.vmem %s7, %s1076
      // Predicated region
      $region49: #{cnn_block_forward.2} parent=39 // pred_check
        %p1078 = pneg %p176
      $region50: #{cnn_block_forward.2} parent=39 // pred_check_branch
        %1080 = sbr.rel (%p1078) target = $region52
      $region51: #{cnn_block_forward.2} parent=39 // pred_region
        _
      $region52: #{cnn_block_forward.2} parent=39 // pred_fallthru
        _
      // Predicated region
      $region53: #{cnn_block_forward.2} parent=39 // pred_check
        %p1081 = pneg %p202
      $region54: #{cnn_block_forward.2} parent=39 // pred_check_branch
        %1083 = sbr.rel (%p1081) target = $region56
      $region55: #{cnn_block_forward.2} parent=39 // pred_region
        _
      $region56: #{cnn_block_forward.2} parent=39 // pred_fallthru
        _
      // Predicated region
      $region57: #{cnn_block_forward.2} parent=39 // pred_check
        %p1084 = pneg %p228
      $region58: #{cnn_block_forward.2} parent=39 // pred_check_branch
        %1086 = sbr.rel (%p1084) target = $region60
      $region59: #{cnn_block_forward.2} parent=39 // pred_region
        _
      $region60: #{cnn_block_forward.2} parent=39 // pred_fallthru
        _
      // Predicated region
      $region61: #{cnn_block_forward.2} parent=39 // pred_check
        %p1087 = pneg %p202
      $region62: #{cnn_block_forward.2} parent=39 // pred_check_branch
        %1089 = sbr.rel (%p1087) target = $region64
      $region63: #{cnn_block_forward.2} parent=39 // pred_region
        %p1090 = scmp.lt.s32.totalorder %s23, 0
        %s1091 = scalar_select %p1090, %s23, 0
        %s1092 = scalar_lea.vmem %s6, %s1091
      $region64: #{cnn_block_forward.2} parent=39 // pred_fallthru
        _
      // Predicated region
      $region65: #{cnn_block_forward.2} parent=39 // pred_check
        %p1093 = pneg %p228
      $region66: #{cnn_block_forward.2} parent=39 // pred_check_branch
        %1095 = sbr.rel (%p1093) target = $region68
      $region67: #{cnn_block_forward.2} parent=39 // pred_region
        %p1096 = scmp.lt.s32.totalorder %s23, 0
        %s1097 = scalar_select %p1096, %s23, 0
        %s1098 = scalar_lea.vmem %s7, %s1097
      $region68: #{cnn_block_forward.2} parent=39 // pred_fallthru
        _
    $region40: #{cnn_block_forward.2} parent=5 // pred_fallthru
      _
    %p1099 = scmp.le.s32.totalorder 2, %s14
    // Predicated region
    $region69: #{cnn_block_forward.2} parent=5 // pred_check
      %p1100 = pneg %p1099
    $region70: #{cnn_block_forward.2} parent=5 // pred_check_branch
      %1102 = sbr.rel (%p1100) target = $region72
    $region71: #{cnn_block_forward.2} parent=5 // pred_region
      %s1103 = ssub.s32 %s14, 2
      // Predicated region
      $region73: #{cnn_block_forward.2} parent=71 // pred_check
        %p1104 = pneg %p182
      $region74: #{cnn_block_forward.2} parent=71 // pred_check_branch
        %1106 = sbr.rel (%p1104) target = $region76
      $region75: #{cnn_block_forward.2} parent=71 // pred_region
        %p1107 = scmp.lt.s32.totalorder %s26, 1
        %s1108 = scalar_select %p1107, %s26, 1
        %p1109 = scmp.lt.s32.totalorder %s25, 0
        %s1110 = scalar_select %p1109, %s25, 0
        %s1111 = smul.addr %s1108, 8
        %s1112 = sadd.s32 %s1110, %s1111
        %s1113 = smul.addr %s1112, 4
        %s1114 = scalar_lea.vmem %s5, %s1113
      $region76: #{cnn_block_forward.2} parent=71 // pred_fallthru
        _
    $region72: #{cnn_block_forward.2} parent=5 // pred_fallthru
      _
  $region6: #{cnn_block_forward.2} parent=0 // loop_footer
    %s18 = sadd.s32 1, %s14
  $region7: #{cnn_block_forward.2} parent=0 // loop_footer_branch
    %13 = sbr.rel target = $region3
  $region8: #{cnn_block_forward.2} parent=0 // loop_exit
    _

</llo_original>
